<compile_context>
chip_gen: v5e
topology: v5e:2x2
jax: 0.10.0
libtpu: 0.0.40
codegen_flags: <defaults>
</compile_context>

<pallas_src>
import jax
import jax.numpy as jnp
from jax.experimental import pallas as pl
from jax.experimental.pallas import tpu as pltpu

_LANES = 128


def _round_up(x: int, m: int) -> int:
    return (x + m - 1) // m * m


def _reward_kernel(x_ref, mix_ref, out_ref):
    # x_ref:   (TBr, 128*F)  interleaved rows: lane l = 128-row-slot (l//F), feature (l%F)
    # mix_ref: (128*F, 128)  resident de-interleave + dot matrix built from w
    # out_ref: (TBr, 128)    lane-dense sigmoid(logits)
    logits = jnp.dot(
        x_ref[...],
        mix_ref[...],
        preferred_element_type=jnp.float32,
        precision=jax.lax.Precision.HIGHEST,
    )
    # Exact sigmoid (exp on EUP, divide on VPU); everything hides under the DMA.
    out_ref[...] = (1.0 / (1.0 + jnp.exp(-logits))).astype(out_ref.dtype)


def reward_function(phi, weight, *, tile_rows: int = 65536, min_pallas_batch: int = 4096):
    """phi: (B, F) f32, weight: (1, F) f32 -> (B, 1) f32.

    Matches torch.sigmoid(nn.Linear(F, 1, bias=False)(phi)).
    """
    B, F = phi.shape
    assert weight.shape == (1, F)
    phi = phi.astype(jnp.float32)
    weight = weight.astype(jnp.float32)

    # Small-B fast path: pallas_call fixed overhead >> the op itself here.
    if B < min_pallas_batch:
        return jax.nn.sigmoid(phi @ weight.T)

    # Align the batch to 128 rows so the row-major reshape below is legal.
    # For 128-aligned B this is a no-op (and the reshape is a free bitcast);
    # otherwise it costs one copy of phi, which only affects ragged batches.
    B_pad = _round_up(B, _LANES)
    if B_pad != B:
        phi = jnp.pad(phi, ((0, B_pad - B), (0, 0)))
    R = B_pad // _LANES

    # Free (same linear order) reshape: no transpose pass over HBM.
    x = phi.reshape(R, _LANES * F)

    # mix[b_lo*F + k, b_lo] = w[k]; everything else 0.  (128*F, 128) f32, resident.
    lane = jnp.arange(_LANES * F)
    mix = (
        (lane[:, None] // F == jnp.arange(_LANES)[None, :]).astype(jnp.float32)
        * weight.reshape(F)[lane % F][:, None]
    )

    # Row-block tile (in units of 128-row groups): multiple of 8, large enough to
    # amortize per-step overhead, capped so the grid keeps >= 2 steps for megacore.
    tbr_req = _round_up(max(tile_rows // _LANES, 8), 8)
    if R <= 8:
        tbr = R  # block dim equal to the full array dim is always legal
    else:
        tbr = max(8, min(tbr_req, _round_up(-(-R // 2), 8), _round_up(R, 8)))

    grid = (pl.cdiv(R, tbr),)
    out = pl.pallas_call(
        _reward_kernel,
        out_shape=jax.ShapeDtypeStruct((R, _LANES), jnp.float32),
        grid=grid,
        in_specs=[
            pl.BlockSpec((tbr, _LANES * F), lambda i: (i, 0)),
            # Constant index_map -> mix matrix stays resident in VMEM.
            pl.BlockSpec((_LANES * F, _LANES), lambda i: (0, 0)),
        ],
        out_specs=pl.BlockSpec((tbr, _LANES), lambda i: (i, 0)),
        compiler_params=pltpu.CompilerParams(
            dimension_semantics=("parallel",),
        ),
    )(x, mix)

    # (R, 128) row-major == logits in original batch order; slice off any padding.
    return out.reshape(B_pad, 1)[:B]


if __name__ == "__main__":
    n_features = 6

    key = jax.random.PRNGKey(0)
    k_phi, k_w, k_phi2, k_phi3 = jax.random.split(key, 4)

    # Synthetic parameters mimicking nn.Linear's uniform(-1/sqrt(F), 1/sqrt(F)) init.
    bound = 1.0 / jnp.sqrt(jnp.float32(n_features))
    weight = jax.random.uniform(
        k_w, (1, n_features), dtype=jnp.float32, minval=-bound, maxval=bound
    )

    # 1) 128-aligned batch, grid of 2 blocks with a partial last block (forced Pallas path).
    B1 = 2176  # 17 * 128
    phi1 = jax.random.normal(k_phi, (B1, n_features), dtype=jnp.float32)
    out1 = jax.block_until_ready(reward_function(phi1, weight, min_pallas_batch=0))
    ref1 = jax.nn.sigmoid(phi1 @ weight.T)
    assert out1.shape == (B1, 1)
    assert jnp.allclose(out1, ref1, atol=1e-5, rtol=1e-5)

    # 2) Non-128-multiple batch (pad path, single block) forced through the Pallas kernel.
    B2 = 300
    phi2 = jax.random.normal(k_phi2, (B2, n_features), dtype=jnp.float32)
    out2 = jax.block_until_ready(reward_function(phi2, weight, min_pallas_batch=0))
    ref2 = jax.nn.sigmoid(phi2 @ weight.T)
    assert out2.shape == (B2, 1)
    assert jnp.allclose(out2, ref2, atol=1e-5, rtol=1e-5)

    # 3) Tiny batch exercises the small-B fast path (default threshold).
    B3 = 8
    phi3 = jax.random.normal(k_phi3, (B3, n_features), dtype=jnp.float32)
    out3 = jax.block_until_ready(reward_function(phi3, weight))
    ref3 = jax.nn.sigmoid(phi3 @ weight.T)
    assert out3.shape == (B3, 1)
    assert jnp.allclose(out3, ref3, atol=1e-5, rtol=1e-5)

    print("KERNEL_OK")
</pallas_src>

<mosaic_0001>
module attributes {stable_mosaic.version = 11 : i64} {
  func.func @_reward_kernel(%arg0: i32, %arg1: memref<16x768xf32, #tpu.memory_space<vmem>>, %arg2: memref<768x128xf32, #tpu.memory_space<vmem>>, %arg3: memref<16x128xf32, #tpu.memory_space<vmem>>) attributes {dimension_semantics = [#tpu.dimension_semantics<parallel>], iteration_bounds = array<i64: 2>, scalar_prefetch = 0 : i64, scratch_operands = 0 : i64, tpu.core_type = #tpu.core_type<tc>, window_params = [{transform_indices = @transform_0, window_bounds = array<i64: 16, 768>}, {pipeline_mode = #tpu.pipeline_mode<synchronous>, transform_indices = @transform_1, window_bounds = array<i64: 768, 128>}, {transform_indices = @transform_2, window_bounds = array<i64: 16, 128>}]} {
    %c0 = arith.constant 0 : index
    %c0_0 = arith.constant 0 : index
    %0 = vector.load %arg1[%c0, %c0_0] : memref<16x768xf32, #tpu.memory_space<vmem>>, vector<16x768xf32>
    %c0_1 = arith.constant 0 : index
    %c0_2 = arith.constant 0 : index
    %1 = vector.load %arg2[%c0_1, %c0_2] : memref<768x128xf32, #tpu.memory_space<vmem>>, vector<768x128xf32>
    %cst = arith.constant dense<0.000000e+00> : vector<16x128xf32>
    %2 = tpu.matmul %0, %1, %cst {dimension_numbers = #tpu.dot_dimension_numbers<[1], [0], [0], [1], [0, 0, 1, 1], [], []>, precision = #tpu.contract_precision<fp32>} : vector<16x768xf32>, vector<768x128xf32>, vector<16x128xf32> -> vector<16x128xf32>
    %cst_3 = arith.constant 0.000000e+00 : f32
    %3 = vector.broadcast %cst_3 : f32 to vector<16x128xf32>
    %4 = arith.subf %3, %2 : vector<16x128xf32>
    %5 = math.exp %4 : vector<16x128xf32>
    %cst_4 = arith.constant 1.000000e+00 : f32
    %6 = vector.broadcast %cst_4 : f32 to vector<16x128xf32>
    %7 = arith.addf %6, %5 : vector<16x128xf32>
    %cst_5 = arith.constant 1.000000e+00 : f32
    %8 = vector.broadcast %cst_5 : f32 to vector<16x128xf32>
    %9 = arith.divf %8, %7 : vector<16x128xf32>
    %c0_6 = arith.constant 0 : index
    %c0_7 = arith.constant 0 : index
    %10 = vector.load %arg3[%c0_6, %c0_7] : memref<16x128xf32, #tpu.memory_space<vmem>>, vector<16x128xf32>
    tpu.vector_store %arg3[%c0_6, %c0_7], %9 {strides = array<i32>} : memref<16x128xf32, #tpu.memory_space<vmem>>, vector<16x128xf32>,
    return
  }
  func.func @transform_0(%arg0: i32) -> (i32, i32) {
    %c0_i32 = arith.constant 0 : i32
    %c0_i32_0 = arith.constant 0 : i32
    return %arg0, %c0_i32 : i32, i32
  }
  func.func @transform_1(%arg0: i32) -> (i32, i32) {
    %c0_i32 = arith.constant 0 : i32
    %c0_i32_0 = arith.constant 0 : i32
    %c0_i32_1 = arith.constant 0 : i32
    return %c0_i32, %c0_i32_0 : i32, i32
  }
  func.func @transform_2(%arg0: i32) -> (i32, i32) {
    %c0_i32 = arith.constant 0 : i32
    %c0_i32_0 = arith.constant 0 : i32
    return %arg0, %c0_i32 : i32, i32
  }
}

</mosaic_0001>

<llo_original>
// kernel: tpu_custom_call.1
$region0: #{tpu_custom_call.1}
  #allocation0 [shape = 'u32[]', space=smem, size = 0x4, offset = 0x4, fixed_abs, tag = 'smem constant byte address 0x4 - core index']
  #allocation1 [shape = 'u32[72,128]{1,0:T(1,128)}', space=vmem, size = 0x9000, scoped, tag = 'internal scratch']
  %s0 = inlined_call_operand.hbm [shape: f32[17,768], index: 0, kind: input, shape index: {}]
  %s1 = inlined_call_operand.hbm [shape: f32[768,128], index: 1, kind: input, shape index: {}]
  %s2 = inlined_call_operand.hbm [shape: f32[17,128], index: 2, kind: output, shape index: {}]
  %s3 = sld [smem:[#allocation0]]
  $region49: #{tpu_custom_call.1} parent=0
    _
  %s5 = ssub.s32 1, %s3
  %s6 = scalar_select 0, %s5, %s3
  $region1: #{tpu_custom_call.1} parent=0
    #allocation2 [shape = 'u8[98304]{0}', space=vmem, size = 0x18000, scoped, tag = 'input window, operand 0']
    #allocation3 [shape = 's32[2]{0}', space=sflag, size = 0x8, scoped, tag = 'scoped memory for tpu_custom_call.1']
    #allocation4 [shape = 's32[2]{0}', space=sflag, size = 0x8, scoped, tag = 'scoped memory for tpu_custom_call.1']
    #allocation5 [shape = 'u8[393216]{0}', space=vmem, size = 0x60000, scoped, tag = 'input window, operand 1, single buffered']
    #allocation6 [shape = 's32[1]{0}', space=sflag, size = 0x4, scoped, tag = 'scoped memory for tpu_custom_call.1']
    #allocation7 [shape = 'u8[16384]{0}', space=vmem, size = 0x4000, scoped, tag = 'output window, operand 0']
    %7 = vsyncpa [#allocation3], 0
    %s8 = scalar_lea.sflag [#allocation3], 1
    %9 = vsyncpa %s8, 0
    %10 = vsyncpa [#allocation6], 0
    %11 = vsyncpa [#allocation4], 0
    %s12 = scalar_lea.sflag [#allocation4], 1
    %13 = vsyncpa %s12, 0
    loop: start=0, step=1, limit=4
    $region2: #{tpu_custom_call.1} parent=1 // loop_pre_header
      _
    $region3: #{tpu_custom_call.1} parent=1 // loop_header
      %s15 = sphi 0, %s19
      %p16 = scmp.ge.s32.totalorder %s15, 4
      %s25 = sphi 0, %s27
      %s28 = sphi 0, %s25
      %s29 = sphi 0, %s28
      %s45 = sphi 0, %s29
      %s49 = sphi 0, %s49
      %s51 = sphi 0, %s49
      %s52 = sphi 0, %s51
      %s66 = sphi 0, %s52
      %s72 = sphi 0, %s74
      %s75 = sphi 0, %s72
      %s76 = sphi 0, %s75
      %s92 = sphi 0, %s76
    $region4: #{tpu_custom_call.1} parent=1 // loop_header_branch
      %18 = sbr.rel (%p16) target = $region8
    $region5: #{tpu_custom_call.1} parent=1 // loop_body
      %s20 = ssub.s32 %s15, 1
      %s21 = ssub.s32 %s15, 2
      %s22 = sadd.s32 %s15, 1
      %s23 = ssub.s32 %s15, %s22
      %p24 = scmp.eq.s32.totalorder %s23, 0
      %s26 = sadd.s32 %s25, 1
      %s27 = scalar_select %p24, %s25, %s26
      %p30 = pneg %p24
      %p31 = scmp.eq.s32.totalorder %s15, 1
      %p32 = por %p30, %p31
      %p33 = scmp.ne.s32.totalorder %s25, %s28
      %p34 = scmp.eq.s32.totalorder %s15, 0
      %p35 = por %p33, %p34
      %p36 = scmp.ne.s32.totalorder %s25, %s28
      %p37 = scmp.eq.s32.totalorder %s20, 1
      %p38 = por %p36, %p37
      %p39 = scmp.ne.s32.totalorder %s28, %s29
      %p40 = scmp.eq.s32.totalorder %s20, 0
      %p41 = por %p39, %p40
      %p42 = scmp.ne.s32.totalorder %s28, %s29
      %p43 = scmp.eq.s32.totalorder %s21, 1
      %p44 = por %p42, %p43
      %p46 = scmp.ne.s32.totalorder %s29, %s45
      %p47 = scmp.eq.s32.totalorder %s21, 0
      %p48 = por %p46, %p47
      %s50 = sadd.s32 %s49, 1
      %p53 = scmp.eq.s32.totalorder %s15, 1
      %p54 = scmp.ne.s32.totalorder %s49, %s51
      %p55 = scmp.eq.s32.totalorder %s15, 0
      %p56 = por %p54, %p55
      %p57 = scmp.ne.s32.totalorder %s49, %s51
      %p58 = scmp.eq.s32.totalorder %s20, 1
      %p59 = por %p57, %p58
      %p60 = scmp.ne.s32.totalorder %s51, %s52
      %p61 = scmp.eq.s32.totalorder %s20, 0
      %p62 = por %p60, %p61
      %p63 = scmp.ne.s32.totalorder %s51, %s52
      %p64 = scmp.eq.s32.totalorder %s21, 1
      %p65 = por %p63, %p64
      %p67 = scmp.ne.s32.totalorder %s52, %s66
      %p68 = scmp.eq.s32.totalorder %s21, 0
      %p69 = por %p67, %p68
      %s70 = ssub.s32 %s15, %s22
      %p71 = scmp.eq.s32.totalorder %s70, 0
      %s73 = sadd.s32 %s72, 1
      %s74 = scalar_select %p71, %s72, %s73
      %p77 = pneg %p71
      %p78 = scmp.eq.s32.totalorder %s15, 1
      %p79 = por %p77, %p78
      %p80 = scmp.ne.s32.totalorder %s72, %s75
      %p81 = scmp.eq.s32.totalorder %s15, 0
      %p82 = por %p80, %p81
      %p83 = scmp.ne.s32.totalorder %s72, %s75
      %p84 = scmp.eq.s32.totalorder %s20, 1
      %p85 = por %p83, %p84
      %p86 = scmp.ne.s32.totalorder %s75, %s76
      %p87 = scmp.eq.s32.totalorder %s20, 0
      %p88 = por %p86, %p87
      %p89 = scmp.ne.s32.totalorder %s75, %s76
      %p90 = scmp.eq.s32.totalorder %s21, 1
      %p91 = por %p89, %p90
      %p93 = scmp.ne.s32.totalorder %s76, %s92
      %p94 = scmp.eq.s32.totalorder %s21, 0
      %p95 = por %p93, %p94
      %p96 = scmp.le.s32.totalorder 1, %s15
      %p97 = scmp.lt.s32.totalorder %s15, 3
      %p98 = pnand %p96, %p97
      %p99 = pneg %p98
      // Predicated region
      $region9: #{tpu_custom_call.1} parent=5 // pred_check
        _
      $region10: #{tpu_custom_call.1} parent=5 // pred_check_branch
        %101 = sbr.rel (%p98) target = $region12
      $region11: #{tpu_custom_call.1} parent=5 // pred_region
        %s102 = ssub.s32 %s15, 1
        // Predicated region
        $region13: #{tpu_custom_call.1} parent=11 // pred_check
          %p103 = pneg %p62
        $region14: #{tpu_custom_call.1} parent=11 // pred_check_branch
          %105 = sbr.rel (%p103) target = $region16
        $region15: #{tpu_custom_call.1} parent=11 // pred_region
          %107 = vsyncadd [#allocation6], 0
          %s108 = sshll.u32 %s1, 4
          %s109 = int_to_ptr.hbm [resolvable:$true] %s108
          %s110 = sshll.u32 [#allocation5], 4
          %s111 = int_to_ptr.vmem [resolvable:$true] %s110
          %116 = dma.hbm_to_vmem [thread:$0]  %s109, 12288, %s111, [#allocation6], 128, 128, 8
        $region16: #{tpu_custom_call.1} parent=11 // pred_fallthru
          _
      $region12: #{tpu_custom_call.1} parent=5 // pred_fallthru
        _
      %p117 = scmp.lt.s32.totalorder %s15, 2
      // Predicated region
      $region17: #{tpu_custom_call.1} parent=5 // pred_check
        %p118 = pneg %p117
      $region18: #{tpu_custom_call.1} parent=5 // pred_check_branch
        %120 = sbr.rel (%p118) target = $region20
      $region19: #{tpu_custom_call.1} parent=5 // pred_region
        // Predicated region
        $region21: #{tpu_custom_call.1} parent=19 // pred_check
          %p121 = pneg %p35
        $region22: #{tpu_custom_call.1} parent=19 // pred_check_branch
          %123 = sbr.rel (%p121) target = $region24
        $region23: #{tpu_custom_call.1} parent=19 // pred_region
          %s124 = sand.u32 %s25, 1
          %s125 = scalar_lea.sflag [#allocation3], %s124
          %s126 = sand.u32 %s25, 1
          %s127 = smul.addr %s126, 96
          %s128 = scalar_lea.vmem [#allocation2], %s127
          %s129 = smul.u32 2, %s15
          %s130 = ssub.s32 3, %s129
          %p131 = scmp.lt.s32.totalorder %s130, 2
          %s132 = scalar_select %p131, %s130, 2
          %s133 = smul.u32 8, %s132
          %s134 = smul.u32 %s133, 6
          %s135 = ssub.s32 96, %s134
          %s136 = sshll.u32 %s135, 4
          %137 = vsyncadd %s125, %s136
          %p138 = scmp.ne.s32.totalorder 0, %s134
          %s139 = smul.addr %s129, 6
          %s140 = smul.addr %s139, 8
          %s141 = scalar_lea.hbm %s0, %s140
          %s142 = smul.u32 48, %s132
          %s143 = sshll.u32 %s141, 4
          %s144 = int_to_ptr.hbm [resolvable:$true] %s143
          %s145 = sshll.u32 %s128, 4
          %s146 = int_to_ptr.vmem [resolvable:$true] %s145
          %s147 = sshll.u32 %s142, 4
          %151 = dma.hbm_to_vmem [thread:$0]  (%p138), %s144, %s147, %s146, %s125, 768, 768, 48
        $region24: #{tpu_custom_call.1} parent=19 // pred_fallthru
          _
      $region20: #{tpu_custom_call.1} parent=5 // pred_fallthru
        _
      %p152 = scmp.le.s32.totalorder 1, %s15
      %p153 = scmp.lt.s32.totalorder %s15, 3
      %p154 = pnand %p152, %p153
      %p155 = pneg %p154
      // Predicated region
      $region25: #{tpu_custom_call.1} parent=5 // pred_check
        _
      $region26: #{tpu_custom_call.1} parent=5 // pred_check_branch
        %157 = sbr.rel (%p154) target = $region28
      $region27: #{tpu_custom_call.1} parent=5 // pred_region
        %s158 = ssub.s32 %s15, 1
        %s159 = sand.u32 %s28, 1
        %s160 = scalar_lea.sflag [#allocation3], %s159
        %s161 = sand.u32 %s28, 1
        %s162 = smul.addr %s161, 96
        %s163 = scalar_lea.vmem [#allocation2], %s162
        // Predicated region
        $region29: #{tpu_custom_call.1} parent=27 // pred_check
          %p164 = pneg %p41
        $region30: #{tpu_custom_call.1} parent=27 // pred_check_branch
          %166 = sbr.rel (%p164) target = $region32
        $region31: #{tpu_custom_call.1} parent=27 // pred_region
          %168 = dma.done %s160, 1536
        $region32: #{tpu_custom_call.1} parent=27 // pred_fallthru
          _
        // Predicated region
        $region33: #{tpu_custom_call.1} parent=27 // pred_check
          %p169 = pneg %p62
        $region34: #{tpu_custom_call.1} parent=27 // pred_check_branch
          %171 = sbr.rel (%p169) target = $region36
        $region35: #{tpu_custom_call.1} parent=27 // pred_region
          %173 = dma.done [#allocation6], 12288
        $region36: #{tpu_custom_call.1} parent=27 // pred_fallthru
          _
        %s174 = sand.u32 %s28, 1
        %s175 = scalar_lea.sflag [#allocation3], %s174
        %s176 = sand.u32 %s28, 1
        %s177 = smul.addr %s176, 96
        %s178 = scalar_lea.vmem [#allocation2], %s177
        %p179 = pneg %p41
        %p180 = pneg %p38
        %p181 = pneg %p62
        %p182 = pneg %p59
        %p183 = pneg %p88
        %p184 = pneg %p85
        %s185 = sand.u32 %s75, 1
        %s186 = scalar_lea.sflag [#allocation4], %s185
        %s187 = sand.u32 %s75, 1
        %s188 = smul.addr %s187, 16
        %s189 = scalar_lea.vmem [#allocation7], %s188
        %s190 = smul.u32 2, %s20
        %s191 = ssub.s32 3, %s190
        %p192 = scmp.lt.s32.totalorder %s191, 2
        %s193 = scalar_select %p192, %s191, 2
        %s194 = smul.u32 8, %s193
        %s195 = smul.u32 %s194, 6
        %s196 = smul.u32 2, %s20
        %s197 = ssub.s32 3, %s196
        %p198 = scmp.lt.s32.totalorder %s197, 2
        %s199 = scalar_select %p198, %s197, 2
        %s200 = smul.u32 8, %s199
        %v201 = vld [vmem:[%s163] sm:$0xff]
        %v202 = vld [vmem:[%s163 + $0x8] sm:$0xff]
        %v203 = vld [vmem:[%s163 + $0x10] sm:$0xff]
        %v204 = vld [vmem:[%s163 + $0x18] sm:$0xff]
        %v205 = vld [vmem:[%s163 + $0x20] sm:$0xff]
        %v206 = vld [vmem:[%s163 + $0x28] sm:$0xff]
        %v207 = vld [vmem:[%s163 + $0x30] sm:$0xff]
        %v208 = vld [vmem:[%s163 + $0x38] sm:$0xff]
        %v209 = vld [vmem:[%s163 + $0x40] sm:$0xff]
        %v210 = vld [vmem:[%s163 + $0x48] sm:$0xff]
        %v211 = vld [vmem:[%s163 + $0x50] sm:$0xff]
        %v212 = vld [vmem:[%s163 + $0x58] sm:$0xff]
        %v213 = vld [vmem:[#allocation5] sm:$0xff]
        %v214 = vld [vmem:[#allocation5 + $0x8] sm:$0xff]
        %v215 = vld [vmem:[#allocation5 + $0x10] sm:$0xff]
        %v216 = vld [vmem:[#allocation5 + $0x18] sm:$0xff]
        %v217 = vld [vmem:[#allocation5 + $0x20] sm:$0xff]
        %v218 = vld [vmem:[#allocation5 + $0x28] sm:$0xff]
        %v219 = vld [vmem:[#allocation5 + $0x30] sm:$0xff]
        %v220 = vld [vmem:[#allocation5 + $0x38] sm:$0xff]
        %v221 = vld [vmem:[#allocation5 + $0x40] sm:$0xff]
        %v222 = vld [vmem:[#allocation5 + $0x48] sm:$0xff]
        %v223 = vld [vmem:[#allocation5 + $0x50] sm:$0xff]
        %v224 = vld [vmem:[#allocation5 + $0x58] sm:$0xff]
        %v225 = vld [vmem:[#allocation5 + $0x60] sm:$0xff]
        %v226 = vld [vmem:[#allocation5 + $0x68] sm:$0xff]
        %v227 = vld [vmem:[#allocation5 + $0x70] sm:$0xff]
        %v228 = vld [vmem:[#allocation5 + $0x78] sm:$0xff]
        %v229 = vld [vmem:[#allocation5 + $0x80] sm:$0xff]
        %v230 = vld [vmem:[#allocation5 + $0x88] sm:$0xff]
        %v231 = vld [vmem:[#allocation5 + $0x90] sm:$0xff]
        %v232 = vld [vmem:[#allocation5 + $0x98] sm:$0xff]
        %v233 = vld [vmem:[#allocation5 + $0xa0] sm:$0xff]
        %v234 = vld [vmem:[#allocation5 + $0xa8] sm:$0xff]
        %v235 = vld [vmem:[#allocation5 + $0xb0] sm:$0xff]
        %v236 = vld [vmem:[#allocation5 + $0xb8] sm:$0xff]
        %v237 = vld [vmem:[#allocation5 + $0xc0] sm:$0xff]
        %v238 = vld [vmem:[#allocation5 + $0xc8] sm:$0xff]
        %v239 = vld [vmem:[#allocation5 + $0xd0] sm:$0xff]
        %v240 = vld [vmem:[#allocation5 + $0xd8] sm:$0xff]
        %v241 = vld [vmem:[#allocation5 + $0xe0] sm:$0xff]
        %v242 = vld [vmem:[#allocation5 + $0xe8] sm:$0xff]
        %v243 = vld [vmem:[#allocation5 + $0xf0] sm:$0xff]
        %v244 = vld [vmem:[#allocation5 + $0xf8] sm:$0xff]
        %v245 = vld [vmem:[#allocation5 + $0x100] sm:$0xff]
        %v246 = vld [vmem:[#allocation5 + $0x108] sm:$0xff]
        %v247 = vld [vmem:[#allocation5 + $0x110] sm:$0xff]
        %v248 = vld [vmem:[#allocation5 + $0x118] sm:$0xff]
        %v249 = vld [vmem:[#allocation5 + $0x120] sm:$0xff]
        %v250 = vld [vmem:[#allocation5 + $0x128] sm:$0xff]
        %v251 = vld [vmem:[#allocation5 + $0x130] sm:$0xff]
        %v252 = vld [vmem:[#allocation5 + $0x138] sm:$0xff]
        %v253 = vld [vmem:[#allocation5 + $0x140] sm:$0xff]
        %v254 = vld [vmem:[#allocation5 + $0x148] sm:$0xff]
        %v255 = vld [vmem:[#allocation5 + $0x150] sm:$0xff]
        %v256 = vld [vmem:[#allocation5 + $0x158] sm:$0xff]
        %v257 = vld [vmem:[#allocation5 + $0x160] sm:$0xff]
        %v258 = vld [vmem:[#allocation5 + $0x168] sm:$0xff]
        %v259 = vld [vmem:[#allocation5 + $0x170] sm:$0xff]
        %v260 = vld [vmem:[#allocation5 + $0x178] sm:$0xff]
        %v261 = vld [vmem:[#allocation5 + $0x180] sm:$0xff]
        %v262 = vld [vmem:[#allocation5 + $0x188] sm:$0xff]
        %v263 = vld [vmem:[#allocation5 + $0x190] sm:$0xff]
        %v264 = vld [vmem:[#allocation5 + $0x198] sm:$0xff]
        %v265 = vld [vmem:[#allocation5 + $0x1a0] sm:$0xff]
        %v266 = vld [vmem:[#allocation5 + $0x1a8] sm:$0xff]
        %v267 = vld [vmem:[#allocation5 + $0x1b0] sm:$0xff]
        %v268 = vld [vmem:[#allocation5 + $0x1b8] sm:$0xff]
        %v269 = vld [vmem:[#allocation5 + $0x1c0] sm:$0xff]
        %v270 = vld [vmem:[#allocation5 + $0x1c8] sm:$0xff]
        %v271 = vld [vmem:[#allocation5 + $0x1d0] sm:$0xff]
        %v272 = vld [vmem:[#allocation5 + $0x1d8] sm:$0xff]
        %v273 = vld [vmem:[#allocation5 + $0x1e0] sm:$0xff]
        %v274 = vld [vmem:[#allocation5 + $0x1e8] sm:$0xff]
        %v275 = vld [vmem:[#allocation5 + $0x1f0] sm:$0xff]
        %v276 = vld [vmem:[#allocation5 + $0x1f8] sm:$0xff]
        %v277 = vld [vmem:[#allocation5 + $0x200] sm:$0xff]
        %v278 = vld [vmem:[#allocation5 + $0x208] sm:$0xff]
        %v279 = vld [vmem:[#allocation5 + $0x210] sm:$0xff]
        %v280 = vld [vmem:[#allocation5 + $0x218] sm:$0xff]
        %v281 = vld [vmem:[#allocation5 + $0x220] sm:$0xff]
        %v282 = vld [vmem:[#allocation5 + $0x228] sm:$0xff]
        %v283 = vld [vmem:[#allocation5 + $0x230] sm:$0xff]
        %v284 = vld [vmem:[#allocation5 + $0x238] sm:$0xff]
        %v285 = vld [vmem:[#allocation5 + $0x240] sm:$0xff]
        %v286 = vld [vmem:[#allocation5 + $0x248] sm:$0xff]
        %v287 = vld [vmem:[#allocation5 + $0x250] sm:$0xff]
        %v288 = vld [vmem:[#allocation5 + $0x258] sm:$0xff]
        %v289 = vld [vmem:[#allocation5 + $0x260] sm:$0xff]
        %v290 = vld [vmem:[#allocation5 + $0x268] sm:$0xff]
        %v291 = vld [vmem:[#allocation5 + $0x270] sm:$0xff]
        %v292 = vld [vmem:[#allocation5 + $0x278] sm:$0xff]
        %v293 = vld [vmem:[#allocation5 + $0x280] sm:$0xff]
        %v294 = vld [vmem:[#allocation5 + $0x288] sm:$0xff]
        %v295 = vld [vmem:[#allocation5 + $0x290] sm:$0xff]
        %v296 = vld [vmem:[#allocation5 + $0x298] sm:$0xff]
        %v297 = vld [vmem:[#allocation5 + $0x2a0] sm:$0xff]
        %v298 = vld [vmem:[#allocation5 + $0x2a8] sm:$0xff]
        %v299 = vld [vmem:[#allocation5 + $0x2b0] sm:$0xff]
        %v300 = vld [vmem:[#allocation5 + $0x2b8] sm:$0xff]
        %v301 = vld [vmem:[#allocation5 + $0x2c0] sm:$0xff]
        %v302 = vld [vmem:[#allocation5 + $0x2c8] sm:$0xff]
        %v303 = vld [vmem:[#allocation5 + $0x2d0] sm:$0xff]
        %v304 = vld [vmem:[#allocation5 + $0x2d8] sm:$0xff]
        %v305 = vld [vmem:[#allocation5 + $0x2e0] sm:$0xff]
        %v306 = vld [vmem:[#allocation5 + $0x2e8] sm:$0xff]
        %v307 = vld [vmem:[#allocation5 + $0x2f0] sm:$0xff]
        %v308 = vld [vmem:[#allocation5 + $0x2f8] sm:$0xff]
        %v309 = vand.u32 %v228, 4294901760
        %310 = vmatpush.msra.mxu0 %v309
        %v311 = vand.u32 %v227, 4294901760
        %312 = vmatpush.msra.mxu0 %v311
        %v313 = vand.u32 %v226, 4294901760
        %314 = vmatpush.msra.mxu0 %v313
        %v315 = vand.u32 %v225, 4294901760
        %316 = vmatpush.msra.mxu0 %v315
        %v317 = vand.u32 %v224, 4294901760
        %318 = vmatpush.msra.mxu0 %v317
        %v319 = vand.u32 %v223, 4294901760
        %320 = vmatpush.msra.mxu0 %v319
        %v321 = vand.u32 %v222, 4294901760
        %322 = vmatpush.msra.mxu0 %v321
        %v323 = vand.u32 %v221, 4294901760
        %324 = vmatpush.msra.mxu0 %v323
        %v325 = vand.u32 %v220, 4294901760
        %326 = vmatpush.msra.mxu0 %v325
        %v327 = vand.u32 %v219, 4294901760
        %328 = vmatpush.msra.mxu0 %v327
        %v329 = vand.u32 %v218, 4294901760
        %330 = vmatpush.msra.mxu0 %v329
        %v331 = vand.u32 %v217, 4294901760
        %332 = vmatpush.msra.mxu0 %v331
        %v333 = vand.u32 %v216, 4294901760
        %334 = vmatpush.msra.mxu0 %v333
        %v335 = vand.u32 %v215, 4294901760
        %336 = vmatpush.msra.mxu0 %v335
        %v337 = vand.u32 %v214, 4294901760
        %338 = vmatpush.msra.mxu0 %v337
        %v339 = vand.u32 %v213, 4294901760
        %340 = vmatpush.msra.mxu0 %v339
        %v341 = vand.u32 %v201, 4294901760
        %v342 = vsub.f32 %v201, %v341
        %v343 = vand.u32 %v342, 4294901760
        %v344 = vsub.f32 %v342, %v343
        %v345 = vand.u32 %v344, 4294901760
        %346 = vmatmul.f32.gmra.mxu0 %v345
        %v347 = vpop.f32.mrf.mxu0
        %v348 = vadd.f32 0.0, %v347
        %v349 = vand.u32 %v207, 4294901760
        %v350 = vsub.f32 %v207, %v349
        %v351 = vand.u32 %v350, 4294901760
        %v352 = vsub.f32 %v350, %v351
        %v353 = vand.u32 %v352, 4294901760
        %354 = vmatmul.f32.gmra.mxu0 %v353
        %v355 = vpop.f32.mrf.mxu0
        %v356 = vadd.f32 0.0, %v355
        %357 = vdwg.mxu0
        %v358 = vand.u32 %v228, 4294901760
        %v359 = vsub.f32 %v228, %v358
        %v360 = vand.u32 %v359, 4294901760
        %v361 = vsub.f32 %v359, %v360
        %v362 = vand.u32 %v361, 4294901760
        %363 = vmatpush.msra.mxu0 %v362
        %v364 = vand.u32 %v227, 4294901760
        %v365 = vsub.f32 %v227, %v364
        %v366 = vand.u32 %v365, 4294901760
        %v367 = vsub.f32 %v365, %v366
        %v368 = vand.u32 %v367, 4294901760
        %369 = vmatpush.msra.mxu0 %v368
        %v370 = vand.u32 %v226, 4294901760
        %v371 = vsub.f32 %v226, %v370
        %v372 = vand.u32 %v371, 4294901760
        %v373 = vsub.f32 %v371, %v372
        %v374 = vand.u32 %v373, 4294901760
        %375 = vmatpush.msra.mxu0 %v374
        %v376 = vand.u32 %v225, 4294901760
        %v377 = vsub.f32 %v225, %v376
        %v378 = vand.u32 %v377, 4294901760
        %v379 = vsub.f32 %v377, %v378
        %v380 = vand.u32 %v379, 4294901760
        %381 = vmatpush.msra.mxu0 %v380
        %v382 = vand.u32 %v224, 4294901760
        %v383 = vsub.f32 %v224, %v382
        %v384 = vand.u32 %v383, 4294901760
        %v385 = vsub.f32 %v383, %v384
        %v386 = vand.u32 %v385, 4294901760
        %387 = vmatpush.msra.mxu0 %v386
        %v388 = vand.u32 %v223, 4294901760
        %v389 = vsub.f32 %v223, %v388
        %v390 = vand.u32 %v389, 4294901760
        %v391 = vsub.f32 %v389, %v390
        %v392 = vand.u32 %v391, 4294901760
        %393 = vmatpush.msra.mxu0 %v392
        %v394 = vand.u32 %v222, 4294901760
        %v395 = vsub.f32 %v222, %v394
        %v396 = vand.u32 %v395, 4294901760
        %v397 = vsub.f32 %v395, %v396
        %v398 = vand.u32 %v397, 4294901760
        %399 = vmatpush.msra.mxu0 %v398
        %v400 = vand.u32 %v221, 4294901760
        %v401 = vsub.f32 %v221, %v400
        %v402 = vand.u32 %v401, 4294901760
        %v403 = vsub.f32 %v401, %v402
        %v404 = vand.u32 %v403, 4294901760
        %405 = vmatpush.msra.mxu0 %v404
        %v406 = vand.u32 %v220, 4294901760
        %v407 = vsub.f32 %v220, %v406
        %v408 = vand.u32 %v407, 4294901760
        %v409 = vsub.f32 %v407, %v408
        %v410 = vand.u32 %v409, 4294901760
        %411 = vmatpush.msra.mxu0 %v410
        %v412 = vand.u32 %v219, 4294901760
        %v413 = vsub.f32 %v219, %v412
        %v414 = vand.u32 %v413, 4294901760
        %v415 = vsub.f32 %v413, %v414
        %v416 = vand.u32 %v415, 4294901760
        %417 = vmatpush.msra.mxu0 %v416
        %v418 = vand.u32 %v218, 4294901760
        %v419 = vsub.f32 %v218, %v418
        %v420 = vand.u32 %v419, 4294901760
        %v421 = vsub.f32 %v419, %v420
        %v422 = vand.u32 %v421, 4294901760
        %423 = vmatpush.msra.mxu0 %v422
        %v424 = vand.u32 %v217, 4294901760
        %v425 = vsub.f32 %v217, %v424
        %v426 = vand.u32 %v425, 4294901760
        %v427 = vsub.f32 %v425, %v426
        %v428 = vand.u32 %v427, 4294901760
        %429 = vmatpush.msra.mxu0 %v428
        %v430 = vand.u32 %v216, 4294901760
        %v431 = vsub.f32 %v216, %v430
        %v432 = vand.u32 %v431, 4294901760
        %v433 = vsub.f32 %v431, %v432
        %v434 = vand.u32 %v433, 4294901760
        %435 = vmatpush.msra.mxu0 %v434
        %v436 = vand.u32 %v215, 4294901760
        %v437 = vsub.f32 %v215, %v436
        %v438 = vand.u32 %v437, 4294901760
        %v439 = vsub.f32 %v437, %v438
        %v440 = vand.u32 %v439, 4294901760
        %441 = vmatpush.msra.mxu0 %v440
        %v442 = vand.u32 %v214, 4294901760
        %v443 = vsub.f32 %v214, %v442
        %v444 = vand.u32 %v443, 4294901760
        %v445 = vsub.f32 %v443, %v444
        %v446 = vand.u32 %v445, 4294901760
        %447 = vmatpush.msra.mxu0 %v446
        %v448 = vand.u32 %v213, 4294901760
        %v449 = vsub.f32 %v213, %v448
        %v450 = vand.u32 %v449, 4294901760
        %v451 = vsub.f32 %v449, %v450
        %v452 = vand.u32 %v451, 4294901760
        %453 = vmatpush.msra.mxu0 %v452
        %v454 = vand.u32 %v201, 4294901760
        %455 = vmatmul.f32.gmra.mxu0 %v454
        %v456 = vpop.f32.mrf.mxu0
        %v457 = vadd.f32 %v348, %v456
        %v458 = vand.u32 %v207, 4294901760
        %459 = vmatmul.f32.gmra.mxu0 %v458
        %v460 = vpop.f32.mrf.mxu0
        %v461 = vadd.f32 %v356, %v460
        %462 = vdwg.mxu0
        %v463 = vand.u32 %v228, 4294901760
        %v464 = vsub.f32 %v228, %v463
        %465 = vmatpush.msra.mxu0 %v464
        %v466 = vand.u32 %v227, 4294901760
        %v467 = vsub.f32 %v227, %v466
        %468 = vmatpush.msra.mxu0 %v467
        %v469 = vand.u32 %v226, 4294901760
        %v470 = vsub.f32 %v226, %v469
        %471 = vmatpush.msra.mxu0 %v470
        %v472 = vand.u32 %v225, 4294901760
        %v473 = vsub.f32 %v225, %v472
        %474 = vmatpush.msra.mxu0 %v473
        %v475 = vand.u32 %v224, 4294901760
        %v476 = vsub.f32 %v224, %v475
        %477 = vmatpush.msra.mxu0 %v476
        %v478 = vand.u32 %v223, 4294901760
        %v479 = vsub.f32 %v223, %v478
        %480 = vmatpush.msra.mxu0 %v479
        %v481 = vand.u32 %v222, 4294901760
        %v482 = vsub.f32 %v222, %v481
        %483 = vmatpush.msra.mxu0 %v482
        %v484 = vand.u32 %v221, 4294901760
        %v485 = vsub.f32 %v221, %v484
        %486 = vmatpush.msra.mxu0 %v485
        %v487 = vand.u32 %v220, 4294901760
        %v488 = vsub.f32 %v220, %v487
        %489 = vmatpush.msra.mxu0 %v488
        %v490 = vand.u32 %v219, 4294901760
        %v491 = vsub.f32 %v219, %v490
        %492 = vmatpush.msra.mxu0 %v491
        %v493 = vand.u32 %v218, 4294901760
        %v494 = vsub.f32 %v218, %v493
        %495 = vmatpush.msra.mxu0 %v494
        %v496 = vand.u32 %v217, 4294901760
        %v497 = vsub.f32 %v217, %v496
        %498 = vmatpush.msra.mxu0 %v497
        %v499 = vand.u32 %v216, 4294901760
        %v500 = vsub.f32 %v216, %v499
        %501 = vmatpush.msra.mxu0 %v500
        %v502 = vand.u32 %v215, 4294901760
        %v503 = vsub.f32 %v215, %v502
        %504 = vmatpush.msra.mxu0 %v503
        %v505 = vand.u32 %v214, 4294901760
        %v506 = vsub.f32 %v214, %v505
        %507 = vmatpush.msra.mxu0 %v506
        %v508 = vand.u32 %v213, 4294901760
        %v509 = vsub.f32 %v213, %v508
        %510 = vmatpush.msra.mxu0 %v509
        %v511 = vand.u32 %v201, 4294901760
        %v512 = vsub.f32 %v201, %v511
        %513 = vmatmul.f32.gmra.mxu0 %v512
        %v514 = vpop.f32.mrf.mxu0
        %v515 = vadd.f32 %v457, %v514
        %v516 = vand.u32 %v207, 4294901760
        %v517 = vsub.f32 %v207, %v516
        %518 = vmatmul.f32.gmra.mxu0 %v517
        %v519 = vpop.f32.mrf.mxu0
        %v520 = vadd.f32 %v461, %v519
        %521 = vdwg.mxu0
        %v522 = vand.u32 %v228, 4294901760
        %523 = vmatpush.msra.mxu0 %v522
        %v524 = vand.u32 %v227, 4294901760
        %525 = vmatpush.msra.mxu0 %v524
        %v526 = vand.u32 %v226, 4294901760
        %527 = vmatpush.msra.mxu0 %v526
        %v528 = vand.u32 %v225, 4294901760
        %529 = vmatpush.msra.mxu0 %v528
        %v530 = vand.u32 %v224, 4294901760
        %531 = vmatpush.msra.mxu0 %v530
        %v532 = vand.u32 %v223, 4294901760
        %533 = vmatpush.msra.mxu0 %v532
        %v534 = vand.u32 %v222, 4294901760
        %535 = vmatpush.msra.mxu0 %v534
        %v536 = vand.u32 %v221, 4294901760
        %537 = vmatpush.msra.mxu0 %v536
        %v538 = vand.u32 %v220, 4294901760
        %539 = vmatpush.msra.mxu0 %v538
        %v540 = vand.u32 %v219, 4294901760
        %541 = vmatpush.msra.mxu0 %v540
        %v542 = vand.u32 %v218, 4294901760
        %543 = vmatpush.msra.mxu0 %v542
        %v544 = vand.u32 %v217, 4294901760
        %545 = vmatpush.msra.mxu0 %v544
        %v546 = vand.u32 %v216, 4294901760
        %547 = vmatpush.msra.mxu0 %v546
        %v548 = vand.u32 %v215, 4294901760
        %549 = vmatpush.msra.mxu0 %v548
        %v550 = vand.u32 %v214, 4294901760
        %551 = vmatpush.msra.mxu0 %v550
        %v552 = vand.u32 %v213, 4294901760
        %553 = vmatpush.msra.mxu0 %v552
        %v554 = vand.u32 %v201, 4294901760
        %v555 = vsub.f32 %v201, %v554
        %v556 = vand.u32 %v555, 4294901760
        %557 = vmatmul.f32.gmra.mxu0 %v556
        %v558 = vpop.f32.mrf.mxu0
        %v559 = vadd.f32 %v515, %v558
        %v560 = vand.u32 %v207, 4294901760
        %v561 = vsub.f32 %v207, %v560
        %v562 = vand.u32 %v561, 4294901760
        %563 = vmatmul.f32.gmra.mxu0 %v562
        %v564 = vpop.f32.mrf.mxu0
        %v565 = vadd.f32 %v520, %v564
        %566 = vdwg.mxu0
        %v567 = vand.u32 %v228, 4294901760
        %v568 = vsub.f32 %v228, %v567
        %v569 = vand.u32 %v568, 4294901760
        %570 = vmatpush.msra.mxu0 %v569
        %v571 = vand.u32 %v227, 4294901760
        %v572 = vsub.f32 %v227, %v571
        %v573 = vand.u32 %v572, 4294901760
        %574 = vmatpush.msra.mxu0 %v573
        %v575 = vand.u32 %v226, 4294901760
        %v576 = vsub.f32 %v226, %v575
        %v577 = vand.u32 %v576, 4294901760
        %578 = vmatpush.msra.mxu0 %v577
        %v579 = vand.u32 %v225, 4294901760
        %v580 = vsub.f32 %v225, %v579
        %v581 = vand.u32 %v580, 4294901760
        %582 = vmatpush.msra.mxu0 %v581
        %v583 = vand.u32 %v224, 4294901760
        %v584 = vsub.f32 %v224, %v583
        %v585 = vand.u32 %v584, 4294901760
        %586 = vmatpush.msra.mxu0 %v585
        %v587 = vand.u32 %v223, 4294901760
        %v588 = vsub.f32 %v223, %v587
        %v589 = vand.u32 %v588, 4294901760
        %590 = vmatpush.msra.mxu0 %v589
        %v591 = vand.u32 %v222, 4294901760
        %v592 = vsub.f32 %v222, %v591
        %v593 = vand.u32 %v592, 4294901760
        %594 = vmatpush.msra.mxu0 %v593
        %v595 = vand.u32 %v221, 4294901760
        %v596 = vsub.f32 %v221, %v595
        %v597 = vand.u32 %v596, 4294901760
        %598 = vmatpush.msra.mxu0 %v597
        %v599 = vand.u32 %v220, 4294901760
        %v600 = vsub.f32 %v220, %v599
        %v601 = vand.u32 %v600, 4294901760
        %602 = vmatpush.msra.mxu0 %v601
        %v603 = vand.u32 %v219, 4294901760
        %v604 = vsub.f32 %v219, %v603
        %v605 = vand.u32 %v604, 4294901760
        %606 = vmatpush.msra.mxu0 %v605
        %v607 = vand.u32 %v218, 4294901760
        %v608 = vsub.f32 %v218, %v607
        %v609 = vand.u32 %v608, 4294901760
        %610 = vmatpush.msra.mxu0 %v609
        %v611 = vand.u32 %v217, 4294901760
        %v612 = vsub.f32 %v217, %v611
        %v613 = vand.u32 %v612, 4294901760
        %614 = vmatpush.msra.mxu0 %v613
        %v615 = vand.u32 %v216, 4294901760
        %v616 = vsub.f32 %v216, %v615
        %v617 = vand.u32 %v616, 4294901760
        %618 = vmatpush.msra.mxu0 %v617
        %v619 = vand.u32 %v215, 4294901760
        %v620 = vsub.f32 %v215, %v619
        %v621 = vand.u32 %v620, 4294901760
        %622 = vmatpush.msra.mxu0 %v621
        %v623 = vand.u32 %v214, 4294901760
        %v624 = vsub.f32 %v214, %v623
        %v625 = vand.u32 %v624, 4294901760
        %626 = vmatpush.msra.mxu0 %v625
        %v627 = vand.u32 %v213, 4294901760
        %v628 = vsub.f32 %v213, %v627
        %v629 = vand.u32 %v628, 4294901760
        %630 = vmatpush.msra.mxu0 %v629
        %v631 = vand.u32 %v201, 4294901760
        %632 = vmatmul.f32.gmra.mxu0 %v631
        %v633 = vpop.f32.mrf.mxu0
        %v634 = vadd.f32 %v559, %v633
        %v635 = vand.u32 %v207, 4294901760
        %636 = vmatmul.f32.gmra.mxu0 %v635
        %v637 = vpop.f32.mrf.mxu0
        %v638 = vadd.f32 %v565, %v637
        %639 = vdwg.mxu0
        %v640 = vand.u32 %v228, 4294901760
        %641 = vmatpush.msra.mxu0 %v640
        %v642 = vand.u32 %v227, 4294901760
        %643 = vmatpush.msra.mxu0 %v642
        %v644 = vand.u32 %v226, 4294901760
        %645 = vmatpush.msra.mxu0 %v644
        %v646 = vand.u32 %v225, 4294901760
        %647 = vmatpush.msra.mxu0 %v646
        %v648 = vand.u32 %v224, 4294901760
        %649 = vmatpush.msra.mxu0 %v648
        %v650 = vand.u32 %v223, 4294901760
        %651 = vmatpush.msra.mxu0 %v650
        %v652 = vand.u32 %v222, 4294901760
        %653 = vmatpush.msra.mxu0 %v652
        %v654 = vand.u32 %v221, 4294901760
        %655 = vmatpush.msra.mxu0 %v654
        %v656 = vand.u32 %v220, 4294901760
        %657 = vmatpush.msra.mxu0 %v656
        %v658 = vand.u32 %v219, 4294901760
        %659 = vmatpush.msra.mxu0 %v658
        %v660 = vand.u32 %v218, 4294901760
        %661 = vmatpush.msra.mxu0 %v660
        %v662 = vand.u32 %v217, 4294901760
        %663 = vmatpush.msra.mxu0 %v662
        %v664 = vand.u32 %v216, 4294901760
        %665 = vmatpush.msra.mxu0 %v664
        %v666 = vand.u32 %v215, 4294901760
        %667 = vmatpush.msra.mxu0 %v666
        %v668 = vand.u32 %v214, 4294901760
        %669 = vmatpush.msra.mxu0 %v668
        %v670 = vand.u32 %v213, 4294901760
        %671 = vmatpush.msra.mxu0 %v670
        %v672 = vand.u32 %v201, 4294901760
        %673 = vmatmul.f32.gmra.mxu0 %v672
        %v674 = vpop.f32.mrf.mxu0
        %v675 = vadd.f32 %v634, %v674
        %v676 = vand.u32 %v207, 4294901760
        %677 = vmatmul.f32.gmra.mxu0 %v676
        %v678 = vpop.f32.mrf.mxu0
        %v679 = vadd.f32 %v638, %v678
        %680 = vdwg.mxu0
        %v681 = vand.u32 %v244, 4294901760
        %682 = vmatpush.msra.mxu0 %v681
        %v683 = vand.u32 %v243, 4294901760
        %684 = vmatpush.msra.mxu0 %v683
        %v685 = vand.u32 %v242, 4294901760
        %686 = vmatpush.msra.mxu0 %v685
        %v687 = vand.u32 %v241, 4294901760
        %688 = vmatpush.msra.mxu0 %v687
        %v689 = vand.u32 %v240, 4294901760
        %690 = vmatpush.msra.mxu0 %v689
        %v691 = vand.u32 %v239, 4294901760
        %692 = vmatpush.msra.mxu0 %v691
        %v693 = vand.u32 %v238, 4294901760
        %694 = vmatpush.msra.mxu0 %v693
        %v695 = vand.u32 %v237, 4294901760
        %696 = vmatpush.msra.mxu0 %v695
        %v697 = vand.u32 %v236, 4294901760
        %698 = vmatpush.msra.mxu0 %v697
        %v699 = vand.u32 %v235, 4294901760
        %700 = vmatpush.msra.mxu0 %v699
        %v701 = vand.u32 %v234, 4294901760
        %702 = vmatpush.msra.mxu0 %v701
        %v703 = vand.u32 %v233, 4294901760
        %704 = vmatpush.msra.mxu0 %v703
        %v705 = vand.u32 %v232, 4294901760
        %706 = vmatpush.msra.mxu0 %v705
        %v707 = vand.u32 %v231, 4294901760
        %708 = vmatpush.msra.mxu0 %v707
        %v709 = vand.u32 %v230, 4294901760
        %710 = vmatpush.msra.mxu0 %v709
        %v711 = vand.u32 %v229, 4294901760
        %712 = vmatpush.msra.mxu0 %v711
        %v713 = vand.u32 %v202, 4294901760
        %v714 = vsub.f32 %v202, %v713
        %v715 = vand.u32 %v714, 4294901760
        %v716 = vsub.f32 %v714, %v715
        %v717 = vand.u32 %v716, 4294901760
        %718 = vmatmul.f32.gmra.mxu0 %v717
        %v719 = vpop.f32.mrf.mxu0
        %v720 = vadd.f32 %v675, %v719
        %v721 = vand.u32 %v208, 4294901760
        %v722 = vsub.f32 %v208, %v721
        %v723 = vand.u32 %v722, 4294901760
        %v724 = vsub.f32 %v722, %v723
        %v725 = vand.u32 %v724, 4294901760
        %726 = vmatmul.f32.gmra.mxu0 %v725
        %v727 = vpop.f32.mrf.mxu0
        %v728 = vadd.f32 %v679, %v727
        %729 = vdwg.mxu0
        %v730 = vand.u32 %v244, 4294901760
        %v731 = vsub.f32 %v244, %v730
        %v732 = vand.u32 %v731, 4294901760
        %v733 = vsub.f32 %v731, %v732
        %v734 = vand.u32 %v733, 4294901760
        %735 = vmatpush.msra.mxu0 %v734
        %v736 = vand.u32 %v243, 4294901760
        %v737 = vsub.f32 %v243, %v736
        %v738 = vand.u32 %v737, 4294901760
        %v739 = vsub.f32 %v737, %v738
        %v740 = vand.u32 %v739, 4294901760
        %741 = vmatpush.msra.mxu0 %v740
        %v742 = vand.u32 %v242, 4294901760
        %v743 = vsub.f32 %v242, %v742
        %v744 = vand.u32 %v743, 4294901760
        %v745 = vsub.f32 %v743, %v744
        %v746 = vand.u32 %v745, 4294901760
        %747 = vmatpush.msra.mxu0 %v746
        %v748 = vand.u32 %v241, 4294901760
        %v749 = vsub.f32 %v241, %v748
        %v750 = vand.u32 %v749, 4294901760
        %v751 = vsub.f32 %v749, %v750
        %v752 = vand.u32 %v751, 4294901760
        %753 = vmatpush.msra.mxu0 %v752
        %v754 = vand.u32 %v240, 4294901760
        %v755 = vsub.f32 %v240, %v754
        %v756 = vand.u32 %v755, 4294901760
        %v757 = vsub.f32 %v755, %v756
        %v758 = vand.u32 %v757, 4294901760
        %759 = vmatpush.msra.mxu0 %v758
        %v760 = vand.u32 %v239, 4294901760
        %v761 = vsub.f32 %v239, %v760
        %v762 = vand.u32 %v761, 4294901760
        %v763 = vsub.f32 %v761, %v762
        %v764 = vand.u32 %v763, 4294901760
        %765 = vmatpush.msra.mxu0 %v764
        %v766 = vand.u32 %v238, 4294901760
        %v767 = vsub.f32 %v238, %v766
        %v768 = vand.u32 %v767, 4294901760
        %v769 = vsub.f32 %v767, %v768
        %v770 = vand.u32 %v769, 4294901760
        %771 = vmatpush.msra.mxu0 %v770
        %v772 = vand.u32 %v237, 4294901760
        %v773 = vsub.f32 %v237, %v772
        %v774 = vand.u32 %v773, 4294901760
        %v775 = vsub.f32 %v773, %v774
        %v776 = vand.u32 %v775, 4294901760
        %777 = vmatpush.msra.mxu0 %v776
        %v778 = vand.u32 %v236, 4294901760
        %v779 = vsub.f32 %v236, %v778
        %v780 = vand.u32 %v779, 4294901760
        %v781 = vsub.f32 %v779, %v780
        %v782 = vand.u32 %v781, 4294901760
        %783 = vmatpush.msra.mxu0 %v782
        %v784 = vand.u32 %v235, 4294901760
        %v785 = vsub.f32 %v235, %v784
        %v786 = vand.u32 %v785, 4294901760
        %v787 = vsub.f32 %v785, %v786
        %v788 = vand.u32 %v787, 4294901760
        %789 = vmatpush.msra.mxu0 %v788
        %v790 = vand.u32 %v234, 4294901760
        %v791 = vsub.f32 %v234, %v790
        %v792 = vand.u32 %v791, 4294901760
        %v793 = vsub.f32 %v791, %v792
        %v794 = vand.u32 %v793, 4294901760
        %795 = vmatpush.msra.mxu0 %v794
        %v796 = vand.u32 %v233, 4294901760
        %v797 = vsub.f32 %v233, %v796
        %v798 = vand.u32 %v797, 4294901760
        %v799 = vsub.f32 %v797, %v798
        %v800 = vand.u32 %v799, 4294901760
        %801 = vmatpush.msra.mxu0 %v800
        %v802 = vand.u32 %v232, 4294901760
        %v803 = vsub.f32 %v232, %v802
        %v804 = vand.u32 %v803, 4294901760
        %v805 = vsub.f32 %v803, %v804
        %v806 = vand.u32 %v805, 4294901760
        %807 = vmatpush.msra.mxu0 %v806
        %v808 = vand.u32 %v231, 4294901760
        %v809 = vsub.f32 %v231, %v808
        %v810 = vand.u32 %v809, 4294901760
        %v811 = vsub.f32 %v809, %v810
        %v812 = vand.u32 %v811, 4294901760
        %813 = vmatpush.msra.mxu0 %v812
        %v814 = vand.u32 %v230, 4294901760
        %v815 = vsub.f32 %v230, %v814
        %v816 = vand.u32 %v815, 4294901760
        %v817 = vsub.f32 %v815, %v816
        %v818 = vand.u32 %v817, 4294901760
        %819 = vmatpush.msra.mxu0 %v818
        %v820 = vand.u32 %v229, 4294901760
        %v821 = vsub.f32 %v229, %v820
        %v822 = vand.u32 %v821, 4294901760
        %v823 = vsub.f32 %v821, %v822
        %v824 = vand.u32 %v823, 4294901760
        %825 = vmatpush.msra.mxu0 %v824
        %v826 = vand.u32 %v202, 4294901760
        %827 = vmatmul.f32.gmra.mxu0 %v826
        %v828 = vpop.f32.mrf.mxu0
        %v829 = vadd.f32 %v720, %v828
        %v830 = vand.u32 %v208, 4294901760
        %831 = vmatmul.f32.gmra.mxu0 %v830
        %v832 = vpop.f32.mrf.mxu0
        %v833 = vadd.f32 %v728, %v832
        %834 = vdwg.mxu0
        %v835 = vand.u32 %v244, 4294901760
        %v836 = vsub.f32 %v244, %v835
        %837 = vmatpush.msra.mxu0 %v836
        %v838 = vand.u32 %v243, 4294901760
        %v839 = vsub.f32 %v243, %v838
        %840 = vmatpush.msra.mxu0 %v839
        %v841 = vand.u32 %v242, 4294901760
        %v842 = vsub.f32 %v242, %v841
        %843 = vmatpush.msra.mxu0 %v842
        %v844 = vand.u32 %v241, 4294901760
        %v845 = vsub.f32 %v241, %v844
        %846 = vmatpush.msra.mxu0 %v845
        %v847 = vand.u32 %v240, 4294901760
        %v848 = vsub.f32 %v240, %v847
        %849 = vmatpush.msra.mxu0 %v848
        %v850 = vand.u32 %v239, 4294901760
        %v851 = vsub.f32 %v239, %v850
        %852 = vmatpush.msra.mxu0 %v851
        %v853 = vand.u32 %v238, 4294901760
        %v854 = vsub.f32 %v238, %v853
        %855 = vmatpush.msra.mxu0 %v854
        %v856 = vand.u32 %v237, 4294901760
        %v857 = vsub.f32 %v237, %v856
        %858 = vmatpush.msra.mxu0 %v857
        %v859 = vand.u32 %v236, 4294901760
        %v860 = vsub.f32 %v236, %v859
        %861 = vmatpush.msra.mxu0 %v860
        %v862 = vand.u32 %v235, 4294901760
        %v863 = vsub.f32 %v235, %v862
        %864 = vmatpush.msra.mxu0 %v863
        %v865 = vand.u32 %v234, 4294901760
        %v866 = vsub.f32 %v234, %v865
        %867 = vmatpush.msra.mxu0 %v866
        %v868 = vand.u32 %v233, 4294901760
        %v869 = vsub.f32 %v233, %v868
        %870 = vmatpush.msra.mxu0 %v869
        %v871 = vand.u32 %v232, 4294901760
        %v872 = vsub.f32 %v232, %v871
        %873 = vmatpush.msra.mxu0 %v872
        %v874 = vand.u32 %v231, 4294901760
        %v875 = vsub.f32 %v231, %v874
        %876 = vmatpush.msra.mxu0 %v875
        %v877 = vand.u32 %v230, 4294901760
        %v878 = vsub.f32 %v230, %v877
        %879 = vmatpush.msra.mxu0 %v878
        %v880 = vand.u32 %v229, 4294901760
        %v881 = vsub.f32 %v229, %v880
        %882 = vmatpush.msra.mxu0 %v881
        %v883 = vand.u32 %v202, 4294901760
        %v884 = vsub.f32 %v202, %v883
        %885 = vmatmul.f32.gmra.mxu0 %v884
        %v886 = vpop.f32.mrf.mxu0
        %v887 = vadd.f32 %v829, %v886
        %v888 = vand.u32 %v208, 4294901760
        %v889 = vsub.f32 %v208, %v888
        %890 = vmatmul.f32.gmra.mxu0 %v889
        %v891 = vpop.f32.mrf.mxu0
        %v892 = vadd.f32 %v833, %v891
        %893 = vdwg.mxu0
        %v894 = vand.u32 %v244, 4294901760
        %895 = vmatpush.msra.mxu0 %v894
        %v896 = vand.u32 %v243, 4294901760
        %897 = vmatpush.msra.mxu0 %v896
        %v898 = vand.u32 %v242, 4294901760
        %899 = vmatpush.msra.mxu0 %v898
        %v900 = vand.u32 %v241, 4294901760
        %901 = vmatpush.msra.mxu0 %v900
        %v902 = vand.u32 %v240, 4294901760
        %903 = vmatpush.msra.mxu0 %v902
        %v904 = vand.u32 %v239, 4294901760
        %905 = vmatpush.msra.mxu0 %v904
        %v906 = vand.u32 %v238, 4294901760
        %907 = vmatpush.msra.mxu0 %v906
        %v908 = vand.u32 %v237, 4294901760
        %909 = vmatpush.msra.mxu0 %v908
        %v910 = vand.u32 %v236, 4294901760
        %911 = vmatpush.msra.mxu0 %v910
        %v912 = vand.u32 %v235, 4294901760
        %913 = vmatpush.msra.mxu0 %v912
        %v914 = vand.u32 %v234, 4294901760
        %915 = vmatpush.msra.mxu0 %v914
        %v916 = vand.u32 %v233, 4294901760
        %917 = vmatpush.msra.mxu0 %v916
        %v918 = vand.u32 %v232, 4294901760
        %919 = vmatpush.msra.mxu0 %v918
        %v920 = vand.u32 %v231, 4294901760
        %921 = vmatpush.msra.mxu0 %v920
        %v922 = vand.u32 %v230, 4294901760
        %923 = vmatpush.msra.mxu0 %v922
        %v924 = vand.u32 %v229, 4294901760
        %925 = vmatpush.msra.mxu0 %v924
        %v926 = vand.u32 %v202, 4294901760
        %v927 = vsub.f32 %v202, %v926
        %v928 = vand.u32 %v927, 4294901760
        %929 = vmatmul.f32.gmra.mxu0 %v928
        %v930 = vpop.f32.mrf.mxu0
        %v931 = vadd.f32 %v887, %v930
        %v932 = vand.u32 %v208, 4294901760
        %v933 = vsub.f32 %v208, %v932
        %v934 = vand.u32 %v933, 4294901760
        %935 = vmatmul.f32.gmra.mxu0 %v934
        %v936 = vpop.f32.mrf.mxu0
        %v937 = vadd.f32 %v892, %v936
        %938 = vdwg.mxu0
        %v939 = vand.u32 %v244, 4294901760
        %v940 = vsub.f32 %v244, %v939
        %v941 = vand.u32 %v940, 4294901760
        %942 = vmatpush.msra.mxu0 %v941
        %v943 = vand.u32 %v243, 4294901760
        %v944 = vsub.f32 %v243, %v943
        %v945 = vand.u32 %v944, 4294901760
        %946 = vmatpush.msra.mxu0 %v945
        %v947 = vand.u32 %v242, 4294901760
        %v948 = vsub.f32 %v242, %v947
        %v949 = vand.u32 %v948, 4294901760
        %950 = vmatpush.msra.mxu0 %v949
        %v951 = vand.u32 %v241, 4294901760
        %v952 = vsub.f32 %v241, %v951
        %v953 = vand.u32 %v952, 4294901760
        %954 = vmatpush.msra.mxu0 %v953
        %v955 = vand.u32 %v240, 4294901760
        %v956 = vsub.f32 %v240, %v955
        %v957 = vand.u32 %v956, 4294901760
        %958 = vmatpush.msra.mxu0 %v957
        %v959 = vand.u32 %v239, 4294901760
        %v960 = vsub.f32 %v239, %v959
        %v961 = vand.u32 %v960, 4294901760
        %962 = vmatpush.msra.mxu0 %v961
        %v963 = vand.u32 %v238, 4294901760
        %v964 = vsub.f32 %v238, %v963
        %v965 = vand.u32 %v964, 4294901760
        %966 = vmatpush.msra.mxu0 %v965
        %v967 = vand.u32 %v237, 4294901760
        %v968 = vsub.f32 %v237, %v967
        %v969 = vand.u32 %v968, 4294901760
        %970 = vmatpush.msra.mxu0 %v969
        %v971 = vand.u32 %v236, 4294901760
        %v972 = vsub.f32 %v236, %v971
        %v973 = vand.u32 %v972, 4294901760
        %974 = vmatpush.msra.mxu0 %v973
        %v975 = vand.u32 %v235, 4294901760
        %v976 = vsub.f32 %v235, %v975
        %v977 = vand.u32 %v976, 4294901760
        %978 = vmatpush.msra.mxu0 %v977
        %v979 = vand.u32 %v234, 4294901760
        %v980 = vsub.f32 %v234, %v979
        %v981 = vand.u32 %v980, 4294901760
        %982 = vmatpush.msra.mxu0 %v981
        %v983 = vand.u32 %v233, 4294901760
        %v984 = vsub.f32 %v233, %v983
        %v985 = vand.u32 %v984, 4294901760
        %986 = vmatpush.msra.mxu0 %v985
        %v987 = vand.u32 %v232, 4294901760
        %v988 = vsub.f32 %v232, %v987
        %v989 = vand.u32 %v988, 4294901760
        %990 = vmatpush.msra.mxu0 %v989
        %v991 = vand.u32 %v231, 4294901760
        %v992 = vsub.f32 %v231, %v991
        %v993 = vand.u32 %v992, 4294901760
        %994 = vmatpush.msra.mxu0 %v993
        %v995 = vand.u32 %v230, 4294901760
        %v996 = vsub.f32 %v230, %v995
        %v997 = vand.u32 %v996, 4294901760
        %998 = vmatpush.msra.mxu0 %v997
        %v999 = vand.u32 %v229, 4294901760
        %v1000 = vsub.f32 %v229, %v999
        %v1001 = vand.u32 %v1000, 4294901760
        %1002 = vmatpush.msra.mxu0 %v1001
        %v1003 = vand.u32 %v202, 4294901760
        %1004 = vmatmul.f32.gmra.mxu0 %v1003
        %v1005 = vpop.f32.mrf.mxu0
        %v1006 = vadd.f32 %v931, %v1005
        %v1007 = vand.u32 %v208, 4294901760
        %1008 = vmatmul.f32.gmra.mxu0 %v1007
        %v1009 = vpop.f32.mrf.mxu0
        %v1010 = vadd.f32 %v937, %v1009
        %1011 = vdwg.mxu0
        %v1012 = vand.u32 %v244, 4294901760
        %1013 = vmatpush.msra.mxu0 %v1012
        %v1014 = vand.u32 %v243, 4294901760
        %1015 = vmatpush.msra.mxu0 %v1014
        %v1016 = vand.u32 %v242, 4294901760
        %1017 = vmatpush.msra.mxu0 %v1016
        %v1018 = vand.u32 %v241, 4294901760
        %1019 = vmatpush.msra.mxu0 %v1018
        %v1020 = vand.u32 %v240, 4294901760
        %1021 = vmatpush.msra.mxu0 %v1020
        %v1022 = vand.u32 %v239, 4294901760
        %1023 = vmatpush.msra.mxu0 %v1022
        %v1024 = vand.u32 %v238, 4294901760
        %1025 = vmatpush.msra.mxu0 %v1024
        %v1026 = vand.u32 %v237, 4294901760
        %1027 = vmatpush.msra.mxu0 %v1026
        %v1028 = vand.u32 %v236, 4294901760
        %1029 = vmatpush.msra.mxu0 %v1028
        %v1030 = vand.u32 %v235, 4294901760
        %1031 = vmatpush.msra.mxu0 %v1030
        %v1032 = vand.u32 %v234, 4294901760
        %1033 = vmatpush.msra.mxu0 %v1032
        %v1034 = vand.u32 %v233, 4294901760
        %1035 = vmatpush.msra.mxu0 %v1034
        %v1036 = vand.u32 %v232, 4294901760
        %1037 = vmatpush.msra.mxu0 %v1036
        %v1038 = vand.u32 %v231, 4294901760
        %1039 = vmatpush.msra.mxu0 %v1038
        %v1040 = vand.u32 %v230, 4294901760
        %1041 = vmatpush.msra.mxu0 %v1040
        %v1042 = vand.u32 %v229, 4294901760
        %1043 = vmatpush.msra.mxu0 %v1042
        %v1044 = vand.u32 %v202, 4294901760
        %1045 = vmatmul.f32.gmra.mxu0 %v1044
        %v1046 = vpop.f32.mrf.mxu0
        %v1047 = vadd.f32 %v1006, %v1046
        %v1048 = vand.u32 %v208, 4294901760
        %1049 = vmatmul.f32.gmra.mxu0 %v1048
        %v1050 = vpop.f32.mrf.mxu0
        %v1051 = vadd.f32 %v1010, %v1050
        %1052 = vdwg.mxu0
        %v1053 = vand.u32 %v260, 4294901760
        %1054 = vmatpush.msra.mxu0 %v1053
        %v1055 = vand.u32 %v259, 4294901760
        %1056 = vmatpush.msra.mxu0 %v1055
        %v1057 = vand.u32 %v258, 4294901760
        %1058 = vmatpush.msra.mxu0 %v1057
        %v1059 = vand.u32 %v257, 4294901760
        %1060 = vmatpush.msra.mxu0 %v1059
        %v1061 = vand.u32 %v256, 4294901760
        %1062 = vmatpush.msra.mxu0 %v1061
        %v1063 = vand.u32 %v255, 4294901760
        %1064 = vmatpush.msra.mxu0 %v1063
        %v1065 = vand.u32 %v254, 4294901760
        %1066 = vmatpush.msra.mxu0 %v1065
        %v1067 = vand.u32 %v253, 4294901760
        %1068 = vmatpush.msra.mxu0 %v1067
        %v1069 = vand.u32 %v252, 4294901760
        %1070 = vmatpush.msra.mxu0 %v1069
        %v1071 = vand.u32 %v251, 4294901760
        %1072 = vmatpush.msra.mxu0 %v1071
        %v1073 = vand.u32 %v250, 4294901760
        %1074 = vmatpush.msra.mxu0 %v1073
        %v1075 = vand.u32 %v249, 4294901760
        %1076 = vmatpush.msra.mxu0 %v1075
        %v1077 = vand.u32 %v248, 4294901760
        %1078 = vmatpush.msra.mxu0 %v1077
        %v1079 = vand.u32 %v247, 4294901760
        %1080 = vmatpush.msra.mxu0 %v1079
        %v1081 = vand.u32 %v246, 4294901760
        %1082 = vmatpush.msra.mxu0 %v1081
        %v1083 = vand.u32 %v245, 4294901760
        %1084 = vmatpush.msra.mxu0 %v1083
        %v1085 = vand.u32 %v203, 4294901760
        %v1086 = vsub.f32 %v203, %v1085
        %v1087 = vand.u32 %v1086, 4294901760
        %v1088 = vsub.f32 %v1086, %v1087
        %v1089 = vand.u32 %v1088, 4294901760
        %1090 = vmatmul.f32.gmra.mxu0 %v1089
        %v1091 = vpop.f32.mrf.mxu0
        %v1092 = vadd.f32 %v1047, %v1091
        %v1093 = vand.u32 %v209, 4294901760
        %v1094 = vsub.f32 %v209, %v1093
        %v1095 = vand.u32 %v1094, 4294901760
        %v1096 = vsub.f32 %v1094, %v1095
        %v1097 = vand.u32 %v1096, 4294901760
        %1098 = vmatmul.f32.gmra.mxu0 %v1097
        %v1099 = vpop.f32.mrf.mxu0
        %v1100 = vadd.f32 %v1051, %v1099
        %1101 = vdwg.mxu0
        %v1102 = vand.u32 %v260, 4294901760
        %v1103 = vsub.f32 %v260, %v1102
        %v1104 = vand.u32 %v1103, 4294901760
        %v1105 = vsub.f32 %v1103, %v1104
        %v1106 = vand.u32 %v1105, 4294901760
        %1107 = vmatpush.msra.mxu0 %v1106
        %v1108 = vand.u32 %v259, 4294901760
        %v1109 = vsub.f32 %v259, %v1108
        %v1110 = vand.u32 %v1109, 4294901760
        %v1111 = vsub.f32 %v1109, %v1110
        %v1112 = vand.u32 %v1111, 4294901760
        %1113 = vmatpush.msra.mxu0 %v1112
        %v1114 = vand.u32 %v258, 4294901760
        %v1115 = vsub.f32 %v258, %v1114
        %v1116 = vand.u32 %v1115, 4294901760
        %v1117 = vsub.f32 %v1115, %v1116
        %v1118 = vand.u32 %v1117, 4294901760
        %1119 = vmatpush.msra.mxu0 %v1118
        %v1120 = vand.u32 %v257, 4294901760
        %v1121 = vsub.f32 %v257, %v1120
        %v1122 = vand.u32 %v1121, 4294901760
        %v1123 = vsub.f32 %v1121, %v1122
        %v1124 = vand.u32 %v1123, 4294901760
        %1125 = vmatpush.msra.mxu0 %v1124
        %v1126 = vand.u32 %v256, 4294901760
        %v1127 = vsub.f32 %v256, %v1126
        %v1128 = vand.u32 %v1127, 4294901760
        %v1129 = vsub.f32 %v1127, %v1128
        %v1130 = vand.u32 %v1129, 4294901760
        %1131 = vmatpush.msra.mxu0 %v1130
        %v1132 = vand.u32 %v255, 4294901760
        %v1133 = vsub.f32 %v255, %v1132
        %v1134 = vand.u32 %v1133, 4294901760
        %v1135 = vsub.f32 %v1133, %v1134
        %v1136 = vand.u32 %v1135, 4294901760
        %1137 = vmatpush.msra.mxu0 %v1136
        %v1138 = vand.u32 %v254, 4294901760
        %v1139 = vsub.f32 %v254, %v1138
        %v1140 = vand.u32 %v1139, 4294901760
        %v1141 = vsub.f32 %v1139, %v1140
        %v1142 = vand.u32 %v1141, 4294901760
        %1143 = vmatpush.msra.mxu0 %v1142
        %v1144 = vand.u32 %v253, 4294901760
        %v1145 = vsub.f32 %v253, %v1144
        %v1146 = vand.u32 %v1145, 4294901760
        %v1147 = vsub.f32 %v1145, %v1146
        %v1148 = vand.u32 %v1147, 4294901760
        %1149 = vmatpush.msra.mxu0 %v1148
        %v1150 = vand.u32 %v252, 4294901760
        %v1151 = vsub.f32 %v252, %v1150
        %v1152 = vand.u32 %v1151, 4294901760
        %v1153 = vsub.f32 %v1151, %v1152
        %v1154 = vand.u32 %v1153, 4294901760
        %1155 = vmatpush.msra.mxu0 %v1154
        %v1156 = vand.u32 %v251, 4294901760
        %v1157 = vsub.f32 %v251, %v1156
        %v1158 = vand.u32 %v1157, 4294901760
        %v1159 = vsub.f32 %v1157, %v1158
        %v1160 = vand.u32 %v1159, 4294901760
        %1161 = vmatpush.msra.mxu0 %v1160
        %v1162 = vand.u32 %v250, 4294901760
        %v1163 = vsub.f32 %v250, %v1162
        %v1164 = vand.u32 %v1163, 4294901760
        %v1165 = vsub.f32 %v1163, %v1164
        %v1166 = vand.u32 %v1165, 4294901760
        %1167 = vmatpush.msra.mxu0 %v1166
        %v1168 = vand.u32 %v249, 4294901760
        %v1169 = vsub.f32 %v249, %v1168
        %v1170 = vand.u32 %v1169, 4294901760
        %v1171 = vsub.f32 %v1169, %v1170
        %v1172 = vand.u32 %v1171, 4294901760
        %1173 = vmatpush.msra.mxu0 %v1172
        %v1174 = vand.u32 %v248, 4294901760
        %v1175 = vsub.f32 %v248, %v1174
        %v1176 = vand.u32 %v1175, 4294901760
        %v1177 = vsub.f32 %v1175, %v1176
        %v1178 = vand.u32 %v1177, 4294901760
        %1179 = vmatpush.msra.mxu0 %v1178
        %v1180 = vand.u32 %v247, 4294901760
        %v1181 = vsub.f32 %v247, %v1180
        %v1182 = vand.u32 %v1181, 4294901760
        %v1183 = vsub.f32 %v1181, %v1182
        %v1184 = vand.u32 %v1183, 4294901760
        %1185 = vmatpush.msra.mxu0 %v1184
        %v1186 = vand.u32 %v246, 4294901760
        %v1187 = vsub.f32 %v246, %v1186
        %v1188 = vand.u32 %v1187, 4294901760
        %v1189 = vsub.f32 %v1187, %v1188
        %v1190 = vand.u32 %v1189, 4294901760
        %1191 = vmatpush.msra.mxu0 %v1190
        %v1192 = vand.u32 %v245, 4294901760
        %v1193 = vsub.f32 %v245, %v1192
        %v1194 = vand.u32 %v1193, 4294901760
        %v1195 = vsub.f32 %v1193, %v1194
        %v1196 = vand.u32 %v1195, 4294901760
        %1197 = vmatpush.msra.mxu0 %v1196
        %v1198 = vand.u32 %v203, 4294901760
        %1199 = vmatmul.f32.gmra.mxu0 %v1198
        %v1200 = vpop.f32.mrf.mxu0
        %v1201 = vadd.f32 %v1092, %v1200
        %v1202 = vand.u32 %v209, 4294901760
        %1203 = vmatmul.f32.gmra.mxu0 %v1202
        %v1204 = vpop.f32.mrf.mxu0
        %v1205 = vadd.f32 %v1100, %v1204
        %1206 = vdwg.mxu0
        %v1207 = vand.u32 %v260, 4294901760
        %v1208 = vsub.f32 %v260, %v1207
        %1209 = vmatpush.msra.mxu0 %v1208
        %v1210 = vand.u32 %v259, 4294901760
        %v1211 = vsub.f32 %v259, %v1210
        %1212 = vmatpush.msra.mxu0 %v1211
        %v1213 = vand.u32 %v258, 4294901760
        %v1214 = vsub.f32 %v258, %v1213
        %1215 = vmatpush.msra.mxu0 %v1214
        %v1216 = vand.u32 %v257, 4294901760
        %v1217 = vsub.f32 %v257, %v1216
        %1218 = vmatpush.msra.mxu0 %v1217
        %v1219 = vand.u32 %v256, 4294901760
        %v1220 = vsub.f32 %v256, %v1219
        %1221 = vmatpush.msra.mxu0 %v1220
        %v1222 = vand.u32 %v255, 4294901760
        %v1223 = vsub.f32 %v255, %v1222
        %1224 = vmatpush.msra.mxu0 %v1223
        %v1225 = vand.u32 %v254, 4294901760
        %v1226 = vsub.f32 %v254, %v1225
        %1227 = vmatpush.msra.mxu0 %v1226
        %v1228 = vand.u32 %v253, 4294901760
        %v1229 = vsub.f32 %v253, %v1228
        %1230 = vmatpush.msra.mxu0 %v1229
        %v1231 = vand.u32 %v252, 4294901760
        %v1232 = vsub.f32 %v252, %v1231
        %1233 = vmatpush.msra.mxu0 %v1232
        %v1234 = vand.u32 %v251, 4294901760
        %v1235 = vsub.f32 %v251, %v1234
        %1236 = vmatpush.msra.mxu0 %v1235
        %v1237 = vand.u32 %v250, 4294901760
        %v1238 = vsub.f32 %v250, %v1237
        %1239 = vmatpush.msra.mxu0 %v1238
        %v1240 = vand.u32 %v249, 4294901760
        %v1241 = vsub.f32 %v249, %v1240
        %1242 = vmatpush.msra.mxu0 %v1241
        %v1243 = vand.u32 %v248, 4294901760
        %v1244 = vsub.f32 %v248, %v1243
        %1245 = vmatpush.msra.mxu0 %v1244
        %v1246 = vand.u32 %v247, 4294901760
        %v1247 = vsub.f32 %v247, %v1246
        %1248 = vmatpush.msra.mxu0 %v1247
        %v1249 = vand.u32 %v246, 4294901760
        %v1250 = vsub.f32 %v246, %v1249
        %1251 = vmatpush.msra.mxu0 %v1250
        %v1252 = vand.u32 %v245, 4294901760
        %v1253 = vsub.f32 %v245, %v1252
        %1254 = vmatpush.msra.mxu0 %v1253
        %v1255 = vand.u32 %v203, 4294901760
        %v1256 = vsub.f32 %v203, %v1255
        %1257 = vmatmul.f32.gmra.mxu0 %v1256
        %v1258 = vpop.f32.mrf.mxu0
        %v1259 = vadd.f32 %v1201, %v1258
        %v1260 = vand.u32 %v209, 4294901760
        %v1261 = vsub.f32 %v209, %v1260
        %1262 = vmatmul.f32.gmra.mxu0 %v1261
        %v1263 = vpop.f32.mrf.mxu0
        %v1264 = vadd.f32 %v1205, %v1263
        %1265 = vdwg.mxu0
        %v1266 = vand.u32 %v260, 4294901760
        %1267 = vmatpush.msra.mxu0 %v1266
        %v1268 = vand.u32 %v259, 4294901760
        %1269 = vmatpush.msra.mxu0 %v1268
        %v1270 = vand.u32 %v258, 4294901760
        %1271 = vmatpush.msra.mxu0 %v1270
        %v1272 = vand.u32 %v257, 4294901760
        %1273 = vmatpush.msra.mxu0 %v1272
        %v1274 = vand.u32 %v256, 4294901760
        %1275 = vmatpush.msra.mxu0 %v1274
        %v1276 = vand.u32 %v255, 4294901760
        %1277 = vmatpush.msra.mxu0 %v1276
        %v1278 = vand.u32 %v254, 4294901760
        %1279 = vmatpush.msra.mxu0 %v1278
        %v1280 = vand.u32 %v253, 4294901760
        %1281 = vmatpush.msra.mxu0 %v1280
        %v1282 = vand.u32 %v252, 4294901760
        %1283 = vmatpush.msra.mxu0 %v1282
        %v1284 = vand.u32 %v251, 4294901760
        %1285 = vmatpush.msra.mxu0 %v1284
        %v1286 = vand.u32 %v250, 4294901760
        %1287 = vmatpush.msra.mxu0 %v1286
        %v1288 = vand.u32 %v249, 4294901760
        %1289 = vmatpush.msra.mxu0 %v1288
        %v1290 = vand.u32 %v248, 4294901760
        %1291 = vmatpush.msra.mxu0 %v1290
        %v1292 = vand.u32 %v247, 4294901760
        %1293 = vmatpush.msra.mxu0 %v1292
        %v1294 = vand.u32 %v246, 4294901760
        %1295 = vmatpush.msra.mxu0 %v1294
        %v1296 = vand.u32 %v245, 4294901760
        %1297 = vmatpush.msra.mxu0 %v1296
        %v1298 = vand.u32 %v203, 4294901760
        %v1299 = vsub.f32 %v203, %v1298
        %v1300 = vand.u32 %v1299, 4294901760
        %1301 = vmatmul.f32.gmra.mxu0 %v1300
        %v1302 = vpop.f32.mrf.mxu0
        %v1303 = vadd.f32 %v1259, %v1302
        %v1304 = vand.u32 %v209, 4294901760
        %v1305 = vsub.f32 %v209, %v1304
        %v1306 = vand.u32 %v1305, 4294901760
        %1307 = vmatmul.f32.gmra.mxu0 %v1306
        %v1308 = vpop.f32.mrf.mxu0
        %v1309 = vadd.f32 %v1264, %v1308
        %1310 = vdwg.mxu0
        %v1311 = vand.u32 %v260, 4294901760
        %v1312 = vsub.f32 %v260, %v1311
        %v1313 = vand.u32 %v1312, 4294901760
        %1314 = vmatpush.msra.mxu0 %v1313
        %v1315 = vand.u32 %v259, 4294901760
        %v1316 = vsub.f32 %v259, %v1315
        %v1317 = vand.u32 %v1316, 4294901760
        %1318 = vmatpush.msra.mxu0 %v1317
        %v1319 = vand.u32 %v258, 4294901760
        %v1320 = vsub.f32 %v258, %v1319
        %v1321 = vand.u32 %v1320, 4294901760
        %1322 = vmatpush.msra.mxu0 %v1321
        %v1323 = vand.u32 %v257, 4294901760
        %v1324 = vsub.f32 %v257, %v1323
        %v1325 = vand.u32 %v1324, 4294901760
        %1326 = vmatpush.msra.mxu0 %v1325
        %v1327 = vand.u32 %v256, 4294901760
        %v1328 = vsub.f32 %v256, %v1327
        %v1329 = vand.u32 %v1328, 4294901760
        %1330 = vmatpush.msra.mxu0 %v1329
        %v1331 = vand.u32 %v255, 4294901760
        %v1332 = vsub.f32 %v255, %v1331
        %v1333 = vand.u32 %v1332, 4294901760
        %1334 = vmatpush.msra.mxu0 %v1333
        %v1335 = vand.u32 %v254, 4294901760
        %v1336 = vsub.f32 %v254, %v1335
        %v1337 = vand.u32 %v1336, 4294901760
        %1338 = vmatpush.msra.mxu0 %v1337
        %v1339 = vand.u32 %v253, 4294901760
        %v1340 = vsub.f32 %v253, %v1339
        %v1341 = vand.u32 %v1340, 4294901760
        %1342 = vmatpush.msra.mxu0 %v1341
        %v1343 = vand.u32 %v252, 4294901760
        %v1344 = vsub.f32 %v252, %v1343
        %v1345 = vand.u32 %v1344, 4294901760
        %1346 = vmatpush.msra.mxu0 %v1345
        %v1347 = vand.u32 %v251, 4294901760
        %v1348 = vsub.f32 %v251, %v1347
        %v1349 = vand.u32 %v1348, 4294901760
        %1350 = vmatpush.msra.mxu0 %v1349
        %v1351 = vand.u32 %v250, 4294901760
        %v1352 = vsub.f32 %v250, %v1351
        %v1353 = vand.u32 %v1352, 4294901760
        %1354 = vmatpush.msra.mxu0 %v1353
        %v1355 = vand.u32 %v249, 4294901760
        %v1356 = vsub.f32 %v249, %v1355
        %v1357 = vand.u32 %v1356, 4294901760
        %1358 = vmatpush.msra.mxu0 %v1357
        %v1359 = vand.u32 %v248, 4294901760
        %v1360 = vsub.f32 %v248, %v1359
        %v1361 = vand.u32 %v1360, 4294901760
        %1362 = vmatpush.msra.mxu0 %v1361
        %v1363 = vand.u32 %v247, 4294901760
        %v1364 = vsub.f32 %v247, %v1363
        %v1365 = vand.u32 %v1364, 4294901760
        %1366 = vmatpush.msra.mxu0 %v1365
        %v1367 = vand.u32 %v246, 4294901760
        %v1368 = vsub.f32 %v246, %v1367
        %v1369 = vand.u32 %v1368, 4294901760
        %1370 = vmatpush.msra.mxu0 %v1369
        %v1371 = vand.u32 %v245, 4294901760
        %v1372 = vsub.f32 %v245, %v1371
        %v1373 = vand.u32 %v1372, 4294901760
        %1374 = vmatpush.msra.mxu0 %v1373
        %v1375 = vand.u32 %v203, 4294901760
        %1376 = vmatmul.f32.gmra.mxu0 %v1375
        %v1377 = vpop.f32.mrf.mxu0
        %v1378 = vadd.f32 %v1303, %v1377
        %v1379 = vand.u32 %v209, 4294901760
        %1380 = vmatmul.f32.gmra.mxu0 %v1379
        %v1381 = vpop.f32.mrf.mxu0
        %v1382 = vadd.f32 %v1309, %v1381
        %1383 = vdwg.mxu0
        %v1384 = vand.u32 %v260, 4294901760
        %1385 = vmatpush.msra.mxu0 %v1384
        %v1386 = vand.u32 %v259, 4294901760
        %1387 = vmatpush.msra.mxu0 %v1386
        %v1388 = vand.u32 %v258, 4294901760
        %1389 = vmatpush.msra.mxu0 %v1388
        %v1390 = vand.u32 %v257, 4294901760
        %1391 = vmatpush.msra.mxu0 %v1390
        %v1392 = vand.u32 %v256, 4294901760
        %1393 = vmatpush.msra.mxu0 %v1392
        %v1394 = vand.u32 %v255, 4294901760
        %1395 = vmatpush.msra.mxu0 %v1394
        %v1396 = vand.u32 %v254, 4294901760
        %1397 = vmatpush.msra.mxu0 %v1396
        %v1398 = vand.u32 %v253, 4294901760
        %1399 = vmatpush.msra.mxu0 %v1398
        %v1400 = vand.u32 %v252, 4294901760
        %1401 = vmatpush.msra.mxu0 %v1400
        %v1402 = vand.u32 %v251, 4294901760
        %1403 = vmatpush.msra.mxu0 %v1402
        %v1404 = vand.u32 %v250, 4294901760
        %1405 = vmatpush.msra.mxu0 %v1404
        %v1406 = vand.u32 %v249, 4294901760
        %1407 = vmatpush.msra.mxu0 %v1406
        %v1408 = vand.u32 %v248, 4294901760
        %1409 = vmatpush.msra.mxu0 %v1408
        %v1410 = vand.u32 %v247, 4294901760
        %1411 = vmatpush.msra.mxu0 %v1410
        %v1412 = vand.u32 %v246, 4294901760
        %1413 = vmatpush.msra.mxu0 %v1412
        %v1414 = vand.u32 %v245, 4294901760
        %1415 = vmatpush.msra.mxu0 %v1414
        %v1416 = vand.u32 %v203, 4294901760
        %1417 = vmatmul.f32.gmra.mxu0 %v1416
        %v1418 = vpop.f32.mrf.mxu0
        %v1419 = vadd.f32 %v1378, %v1418
        %v1420 = vand.u32 %v209, 4294901760
        %1421 = vmatmul.f32.gmra.mxu0 %v1420
        %v1422 = vpop.f32.mrf.mxu0
        %v1423 = vadd.f32 %v1382, %v1422
        %1424 = vdwg.mxu0
        %v1425 = vand.u32 %v276, 4294901760
        %1426 = vmatpush.msra.mxu0 %v1425
        %v1427 = vand.u32 %v275, 4294901760
        %1428 = vmatpush.msra.mxu0 %v1427
        %v1429 = vand.u32 %v274, 4294901760
        %1430 = vmatpush.msra.mxu0 %v1429
        %v1431 = vand.u32 %v273, 4294901760
        %1432 = vmatpush.msra.mxu0 %v1431
        %v1433 = vand.u32 %v272, 4294901760
        %1434 = vmatpush.msra.mxu0 %v1433
        %v1435 = vand.u32 %v271, 4294901760
        %1436 = vmatpush.msra.mxu0 %v1435
        %v1437 = vand.u32 %v270, 4294901760
        %1438 = vmatpush.msra.mxu0 %v1437
        %v1439 = vand.u32 %v269, 4294901760
        %1440 = vmatpush.msra.mxu0 %v1439
        %v1441 = vand.u32 %v268, 4294901760
        %1442 = vmatpush.msra.mxu0 %v1441
        %v1443 = vand.u32 %v267, 4294901760
        %1444 = vmatpush.msra.mxu0 %v1443
        %v1445 = vand.u32 %v266, 4294901760
        %1446 = vmatpush.msra.mxu0 %v1445
        %v1447 = vand.u32 %v265, 4294901760
        %1448 = vmatpush.msra.mxu0 %v1447
        %v1449 = vand.u32 %v264, 4294901760
        %1450 = vmatpush.msra.mxu0 %v1449
        %v1451 = vand.u32 %v263, 4294901760
        %1452 = vmatpush.msra.mxu0 %v1451
        %v1453 = vand.u32 %v262, 4294901760
        %1454 = vmatpush.msra.mxu0 %v1453
        %v1455 = vand.u32 %v261, 4294901760
        %1456 = vmatpush.msra.mxu0 %v1455
        %v1457 = vand.u32 %v204, 4294901760
        %v1458 = vsub.f32 %v204, %v1457
        %v1459 = vand.u32 %v1458, 4294901760
        %v1460 = vsub.f32 %v1458, %v1459
        %v1461 = vand.u32 %v1460, 4294901760
        %1462 = vmatmul.f32.gmra.mxu0 %v1461
        %v1463 = vpop.f32.mrf.mxu0
        %v1464 = vadd.f32 %v1419, %v1463
        %v1465 = vand.u32 %v210, 4294901760
        %v1466 = vsub.f32 %v210, %v1465
        %v1467 = vand.u32 %v1466, 4294901760
        %v1468 = vsub.f32 %v1466, %v1467
        %v1469 = vand.u32 %v1468, 4294901760
        %1470 = vmatmul.f32.gmra.mxu0 %v1469
        %v1471 = vpop.f32.mrf.mxu0
        %v1472 = vadd.f32 %v1423, %v1471
        %1473 = vdwg.mxu0
        %v1474 = vand.u32 %v276, 4294901760
        %v1475 = vsub.f32 %v276, %v1474
        %v1476 = vand.u32 %v1475, 4294901760
        %v1477 = vsub.f32 %v1475, %v1476
        %v1478 = vand.u32 %v1477, 4294901760
        %1479 = vmatpush.msra.mxu0 %v1478
        %v1480 = vand.u32 %v275, 4294901760
        %v1481 = vsub.f32 %v275, %v1480
        %v1482 = vand.u32 %v1481, 4294901760
        %v1483 = vsub.f32 %v1481, %v1482
        %v1484 = vand.u32 %v1483, 4294901760
        %1485 = vmatpush.msra.mxu0 %v1484
        %v1486 = vand.u32 %v274, 4294901760
        %v1487 = vsub.f32 %v274, %v1486
        %v1488 = vand.u32 %v1487, 4294901760
        %v1489 = vsub.f32 %v1487, %v1488
        %v1490 = vand.u32 %v1489, 4294901760
        %1491 = vmatpush.msra.mxu0 %v1490
        %v1492 = vand.u32 %v273, 4294901760
        %v1493 = vsub.f32 %v273, %v1492
        %v1494 = vand.u32 %v1493, 4294901760
        %v1495 = vsub.f32 %v1493, %v1494
        %v1496 = vand.u32 %v1495, 4294901760
        %1497 = vmatpush.msra.mxu0 %v1496
        %v1498 = vand.u32 %v272, 4294901760
        %v1499 = vsub.f32 %v272, %v1498
        %v1500 = vand.u32 %v1499, 4294901760
        %v1501 = vsub.f32 %v1499, %v1500
        %v1502 = vand.u32 %v1501, 4294901760
        %1503 = vmatpush.msra.mxu0 %v1502
        %v1504 = vand.u32 %v271, 4294901760
        %v1505 = vsub.f32 %v271, %v1504
        %v1506 = vand.u32 %v1505, 4294901760
        %v1507 = vsub.f32 %v1505, %v1506
        %v1508 = vand.u32 %v1507, 4294901760
        %1509 = vmatpush.msra.mxu0 %v1508
        %v1510 = vand.u32 %v270, 4294901760
        %v1511 = vsub.f32 %v270, %v1510
        %v1512 = vand.u32 %v1511, 4294901760
        %v1513 = vsub.f32 %v1511, %v1512
        %v1514 = vand.u32 %v1513, 4294901760
        %1515 = vmatpush.msra.mxu0 %v1514
        %v1516 = vand.u32 %v269, 4294901760
        %v1517 = vsub.f32 %v269, %v1516
        %v1518 = vand.u32 %v1517, 4294901760
        %v1519 = vsub.f32 %v1517, %v1518
        %v1520 = vand.u32 %v1519, 4294901760
        %1521 = vmatpush.msra.mxu0 %v1520
        %v1522 = vand.u32 %v268, 4294901760
        %v1523 = vsub.f32 %v268, %v1522
        %v1524 = vand.u32 %v1523, 4294901760
        %v1525 = vsub.f32 %v1523, %v1524
        %v1526 = vand.u32 %v1525, 4294901760
        %1527 = vmatpush.msra.mxu0 %v1526
        %v1528 = vand.u32 %v267, 4294901760
        %v1529 = vsub.f32 %v267, %v1528
        %v1530 = vand.u32 %v1529, 4294901760
        %v1531 = vsub.f32 %v1529, %v1530
        %v1532 = vand.u32 %v1531, 4294901760
        %1533 = vmatpush.msra.mxu0 %v1532
        %v1534 = vand.u32 %v266, 4294901760
        %v1535 = vsub.f32 %v266, %v1534
        %v1536 = vand.u32 %v1535, 4294901760
        %v1537 = vsub.f32 %v1535, %v1536
        %v1538 = vand.u32 %v1537, 4294901760
        %1539 = vmatpush.msra.mxu0 %v1538
        %v1540 = vand.u32 %v265, 4294901760
        %v1541 = vsub.f32 %v265, %v1540
        %v1542 = vand.u32 %v1541, 4294901760
        %v1543 = vsub.f32 %v1541, %v1542
        %v1544 = vand.u32 %v1543, 4294901760
        %1545 = vmatpush.msra.mxu0 %v1544
        %v1546 = vand.u32 %v264, 4294901760
        %v1547 = vsub.f32 %v264, %v1546
        %v1548 = vand.u32 %v1547, 4294901760
        %v1549 = vsub.f32 %v1547, %v1548
        %v1550 = vand.u32 %v1549, 4294901760
        %1551 = vmatpush.msra.mxu0 %v1550
        %v1552 = vand.u32 %v263, 4294901760
        %v1553 = vsub.f32 %v263, %v1552
        %v1554 = vand.u32 %v1553, 4294901760
        %v1555 = vsub.f32 %v1553, %v1554
        %v1556 = vand.u32 %v1555, 4294901760
        %1557 = vmatpush.msra.mxu0 %v1556
        %v1558 = vand.u32 %v262, 4294901760
        %v1559 = vsub.f32 %v262, %v1558
        %v1560 = vand.u32 %v1559, 4294901760
        %v1561 = vsub.f32 %v1559, %v1560
        %v1562 = vand.u32 %v1561, 4294901760
        %1563 = vmatpush.msra.mxu0 %v1562
        %v1564 = vand.u32 %v261, 4294901760
        %v1565 = vsub.f32 %v261, %v1564
        %v1566 = vand.u32 %v1565, 4294901760
        %v1567 = vsub.f32 %v1565, %v1566
        %v1568 = vand.u32 %v1567, 4294901760
        %1569 = vmatpush.msra.mxu0 %v1568
        %v1570 = vand.u32 %v204, 4294901760
        %1571 = vmatmul.f32.gmra.mxu0 %v1570
        %v1572 = vpop.f32.mrf.mxu0
        %v1573 = vadd.f32 %v1464, %v1572
        %v1574 = vand.u32 %v210, 4294901760
        %1575 = vmatmul.f32.gmra.mxu0 %v1574
        %v1576 = vpop.f32.mrf.mxu0
        %v1577 = vadd.f32 %v1472, %v1576
        %1578 = vdwg.mxu0
        %v1579 = vand.u32 %v276, 4294901760
        %v1580 = vsub.f32 %v276, %v1579
        %1581 = vmatpush.msra.mxu0 %v1580
        %v1582 = vand.u32 %v275, 4294901760
        %v1583 = vsub.f32 %v275, %v1582
        %1584 = vmatpush.msra.mxu0 %v1583
        %v1585 = vand.u32 %v274, 4294901760
        %v1586 = vsub.f32 %v274, %v1585
        %1587 = vmatpush.msra.mxu0 %v1586
        %v1588 = vand.u32 %v273, 4294901760
        %v1589 = vsub.f32 %v273, %v1588
        %1590 = vmatpush.msra.mxu0 %v1589
        %v1591 = vand.u32 %v272, 4294901760
        %v1592 = vsub.f32 %v272, %v1591
        %1593 = vmatpush.msra.mxu0 %v1592
        %v1594 = vand.u32 %v271, 4294901760
        %v1595 = vsub.f32 %v271, %v1594
        %1596 = vmatpush.msra.mxu0 %v1595
        %v1597 = vand.u32 %v270, 4294901760
        %v1598 = vsub.f32 %v270, %v1597
        %1599 = vmatpush.msra.mxu0 %v1598
        %v1600 = vand.u32 %v269, 4294901760
        %v1601 = vsub.f32 %v269, %v1600
        %1602 = vmatpush.msra.mxu0 %v1601
        %v1603 = vand.u32 %v268, 4294901760
        %v1604 = vsub.f32 %v268, %v1603
        %1605 = vmatpush.msra.mxu0 %v1604
        %v1606 = vand.u32 %v267, 4294901760
        %v1607 = vsub.f32 %v267, %v1606
        %1608 = vmatpush.msra.mxu0 %v1607
        %v1609 = vand.u32 %v266, 4294901760
        %v1610 = vsub.f32 %v266, %v1609
        %1611 = vmatpush.msra.mxu0 %v1610
        %v1612 = vand.u32 %v265, 4294901760
        %v1613 = vsub.f32 %v265, %v1612
        %1614 = vmatpush.msra.mxu0 %v1613
        %v1615 = vand.u32 %v264, 4294901760
        %v1616 = vsub.f32 %v264, %v1615
        %1617 = vmatpush.msra.mxu0 %v1616
        %v1618 = vand.u32 %v263, 4294901760
        %v1619 = vsub.f32 %v263, %v1618
        %1620 = vmatpush.msra.mxu0 %v1619
        %v1621 = vand.u32 %v262, 4294901760
        %v1622 = vsub.f32 %v262, %v1621
        %1623 = vmatpush.msra.mxu0 %v1622
        %v1624 = vand.u32 %v261, 4294901760
        %v1625 = vsub.f32 %v261, %v1624
        %1626 = vmatpush.msra.mxu0 %v1625
        %v1627 = vand.u32 %v204, 4294901760
        %v1628 = vsub.f32 %v204, %v1627
        %1629 = vmatmul.f32.gmra.mxu0 %v1628
        %v1630 = vpop.f32.mrf.mxu0
        %v1631 = vadd.f32 %v1573, %v1630
        %v1632 = vand.u32 %v210, 4294901760
        %v1633 = vsub.f32 %v210, %v1632
        %1634 = vmatmul.f32.gmra.mxu0 %v1633
        %v1635 = vpop.f32.mrf.mxu0
        %v1636 = vadd.f32 %v1577, %v1635
        %1637 = vdwg.mxu0
        %v1638 = vand.u32 %v276, 4294901760
        %1639 = vmatpush.msra.mxu0 %v1638
        %v1640 = vand.u32 %v275, 4294901760
        %1641 = vmatpush.msra.mxu0 %v1640
        %v1642 = vand.u32 %v274, 4294901760
        %1643 = vmatpush.msra.mxu0 %v1642
        %v1644 = vand.u32 %v273, 4294901760
        %1645 = vmatpush.msra.mxu0 %v1644
        %v1646 = vand.u32 %v272, 4294901760
        %1647 = vmatpush.msra.mxu0 %v1646
        %v1648 = vand.u32 %v271, 4294901760
        %1649 = vmatpush.msra.mxu0 %v1648
        %v1650 = vand.u32 %v270, 4294901760
        %1651 = vmatpush.msra.mxu0 %v1650
        %v1652 = vand.u32 %v269, 4294901760
        %1653 = vmatpush.msra.mxu0 %v1652
        %v1654 = vand.u32 %v268, 4294901760
        %1655 = vmatpush.msra.mxu0 %v1654
        %v1656 = vand.u32 %v267, 4294901760
        %1657 = vmatpush.msra.mxu0 %v1656
        %v1658 = vand.u32 %v266, 4294901760
        %1659 = vmatpush.msra.mxu0 %v1658
        %v1660 = vand.u32 %v265, 4294901760
        %1661 = vmatpush.msra.mxu0 %v1660
        %v1662 = vand.u32 %v264, 4294901760
        %1663 = vmatpush.msra.mxu0 %v1662
        %v1664 = vand.u32 %v263, 4294901760
        %1665 = vmatpush.msra.mxu0 %v1664
        %v1666 = vand.u32 %v262, 4294901760
        %1667 = vmatpush.msra.mxu0 %v1666
        %v1668 = vand.u32 %v261, 4294901760
        %1669 = vmatpush.msra.mxu0 %v1668
        %v1670 = vand.u32 %v204, 4294901760
        %v1671 = vsub.f32 %v204, %v1670
        %v1672 = vand.u32 %v1671, 4294901760
        %1673 = vmatmul.f32.gmra.mxu0 %v1672
        %v1674 = vpop.f32.mrf.mxu0
        %v1675 = vadd.f32 %v1631, %v1674
        %v1676 = vand.u32 %v210, 4294901760
        %v1677 = vsub.f32 %v210, %v1676
        %v1678 = vand.u32 %v1677, 4294901760
        %1679 = vmatmul.f32.gmra.mxu0 %v1678
        %v1680 = vpop.f32.mrf.mxu0
        %v1681 = vadd.f32 %v1636, %v1680
        %1682 = vdwg.mxu0
        %v1683 = vand.u32 %v276, 4294901760
        %v1684 = vsub.f32 %v276, %v1683
        %v1685 = vand.u32 %v1684, 4294901760
        %1686 = vmatpush.msra.mxu0 %v1685
        %v1687 = vand.u32 %v275, 4294901760
        %v1688 = vsub.f32 %v275, %v1687
        %v1689 = vand.u32 %v1688, 4294901760
        %1690 = vmatpush.msra.mxu0 %v1689
        %v1691 = vand.u32 %v274, 4294901760
        %v1692 = vsub.f32 %v274, %v1691
        %v1693 = vand.u32 %v1692, 4294901760
        %1694 = vmatpush.msra.mxu0 %v1693
        %v1695 = vand.u32 %v273, 4294901760
        %v1696 = vsub.f32 %v273, %v1695
        %v1697 = vand.u32 %v1696, 4294901760
        %1698 = vmatpush.msra.mxu0 %v1697
        %v1699 = vand.u32 %v272, 4294901760
        %v1700 = vsub.f32 %v272, %v1699
        %v1701 = vand.u32 %v1700, 4294901760
        %1702 = vmatpush.msra.mxu0 %v1701
        %v1703 = vand.u32 %v271, 4294901760
        %v1704 = vsub.f32 %v271, %v1703
        %v1705 = vand.u32 %v1704, 4294901760
        %1706 = vmatpush.msra.mxu0 %v1705
        %v1707 = vand.u32 %v270, 4294901760
        %v1708 = vsub.f32 %v270, %v1707
        %v1709 = vand.u32 %v1708, 4294901760
        %1710 = vmatpush.msra.mxu0 %v1709
        %v1711 = vand.u32 %v269, 4294901760
        %v1712 = vsub.f32 %v269, %v1711
        %v1713 = vand.u32 %v1712, 4294901760
        %1714 = vmatpush.msra.mxu0 %v1713
        %v1715 = vand.u32 %v268, 4294901760
        %v1716 = vsub.f32 %v268, %v1715
        %v1717 = vand.u32 %v1716, 4294901760
        %1718 = vmatpush.msra.mxu0 %v1717
        %v1719 = vand.u32 %v267, 4294901760
        %v1720 = vsub.f32 %v267, %v1719
        %v1721 = vand.u32 %v1720, 4294901760
        %1722 = vmatpush.msra.mxu0 %v1721
        %v1723 = vand.u32 %v266, 4294901760
        %v1724 = vsub.f32 %v266, %v1723
        %v1725 = vand.u32 %v1724, 4294901760
        %1726 = vmatpush.msra.mxu0 %v1725
        %v1727 = vand.u32 %v265, 4294901760
        %v1728 = vsub.f32 %v265, %v1727
        %v1729 = vand.u32 %v1728, 4294901760
        %1730 = vmatpush.msra.mxu0 %v1729
        %v1731 = vand.u32 %v264, 4294901760
        %v1732 = vsub.f32 %v264, %v1731
        %v1733 = vand.u32 %v1732, 4294901760
        %1734 = vmatpush.msra.mxu0 %v1733
        %v1735 = vand.u32 %v263, 4294901760
        %v1736 = vsub.f32 %v263, %v1735
        %v1737 = vand.u32 %v1736, 4294901760
        %1738 = vmatpush.msra.mxu0 %v1737
        %v1739 = vand.u32 %v262, 4294901760
        %v1740 = vsub.f32 %v262, %v1739
        %v1741 = vand.u32 %v1740, 4294901760
        %1742 = vmatpush.msra.mxu0 %v1741
        %v1743 = vand.u32 %v261, 4294901760
        %v1744 = vsub.f32 %v261, %v1743
        %v1745 = vand.u32 %v1744, 4294901760
        %1746 = vmatpush.msra.mxu0 %v1745
        %v1747 = vand.u32 %v204, 4294901760
        %1748 = vmatmul.f32.gmra.mxu0 %v1747
        %v1749 = vpop.f32.mrf.mxu0
        %v1750 = vadd.f32 %v1675, %v1749
        %v1751 = vand.u32 %v210, 4294901760
        %1752 = vmatmul.f32.gmra.mxu0 %v1751
        %v1753 = vpop.f32.mrf.mxu0
        %v1754 = vadd.f32 %v1681, %v1753
        %1755 = vdwg.mxu0
        %v1756 = vand.u32 %v276, 4294901760
        %1757 = vmatpush.msra.mxu0 %v1756
        %v1758 = vand.u32 %v275, 4294901760
        %1759 = vmatpush.msra.mxu0 %v1758
        %v1760 = vand.u32 %v274, 4294901760
        %1761 = vmatpush.msra.mxu0 %v1760
        %v1762 = vand.u32 %v273, 4294901760
        %1763 = vmatpush.msra.mxu0 %v1762
        %v1764 = vand.u32 %v272, 4294901760
        %1765 = vmatpush.msra.mxu0 %v1764
        %v1766 = vand.u32 %v271, 4294901760
        %1767 = vmatpush.msra.mxu0 %v1766
        %v1768 = vand.u32 %v270, 4294901760
        %1769 = vmatpush.msra.mxu0 %v1768
        %v1770 = vand.u32 %v269, 4294901760
        %1771 = vmatpush.msra.mxu0 %v1770
        %v1772 = vand.u32 %v268, 4294901760
        %1773 = vmatpush.msra.mxu0 %v1772
        %v1774 = vand.u32 %v267, 4294901760
        %1775 = vmatpush.msra.mxu0 %v1774
        %v1776 = vand.u32 %v266, 4294901760
        %1777 = vmatpush.msra.mxu0 %v1776
        %v1778 = vand.u32 %v265, 4294901760
        %1779 = vmatpush.msra.mxu0 %v1778
        %v1780 = vand.u32 %v264, 4294901760
        %1781 = vmatpush.msra.mxu0 %v1780
        %v1782 = vand.u32 %v263, 4294901760
        %1783 = vmatpush.msra.mxu0 %v1782
        %v1784 = vand.u32 %v262, 4294901760
        %1785 = vmatpush.msra.mxu0 %v1784
        %v1786 = vand.u32 %v261, 4294901760
        %1787 = vmatpush.msra.mxu0 %v1786
        %v1788 = vand.u32 %v204, 4294901760
        %1789 = vmatmul.f32.gmra.mxu0 %v1788
        %v1790 = vpop.f32.mrf.mxu0
        %v1791 = vadd.f32 %v1750, %v1790
        %v1792 = vand.u32 %v210, 4294901760
        %1793 = vmatmul.f32.gmra.mxu0 %v1792
        %v1794 = vpop.f32.mrf.mxu0
        %v1795 = vadd.f32 %v1754, %v1794
        %1796 = vdwg.mxu0
        %v1797 = vand.u32 %v292, 4294901760
        %1798 = vmatpush.msra.mxu0 %v1797
        %v1799 = vand.u32 %v291, 4294901760
        %1800 = vmatpush.msra.mxu0 %v1799
        %v1801 = vand.u32 %v290, 4294901760
        %1802 = vmatpush.msra.mxu0 %v1801
        %v1803 = vand.u32 %v289, 4294901760
        %1804 = vmatpush.msra.mxu0 %v1803
        %v1805 = vand.u32 %v288, 4294901760
        %1806 = vmatpush.msra.mxu0 %v1805
        %v1807 = vand.u32 %v287, 4294901760
        %1808 = vmatpush.msra.mxu0 %v1807
        %v1809 = vand.u32 %v286, 4294901760
        %1810 = vmatpush.msra.mxu0 %v1809
        %v1811 = vand.u32 %v285, 4294901760
        %1812 = vmatpush.msra.mxu0 %v1811
        %v1813 = vand.u32 %v284, 4294901760
        %1814 = vmatpush.msra.mxu0 %v1813
        %v1815 = vand.u32 %v283, 4294901760
        %1816 = vmatpush.msra.mxu0 %v1815
        %v1817 = vand.u32 %v282, 4294901760
        %1818 = vmatpush.msra.mxu0 %v1817
        %v1819 = vand.u32 %v281, 4294901760
        %1820 = vmatpush.msra.mxu0 %v1819
        %v1821 = vand.u32 %v280, 4294901760
        %1822 = vmatpush.msra.mxu0 %v1821
        %v1823 = vand.u32 %v279, 4294901760
        %1824 = vmatpush.msra.mxu0 %v1823
        %v1825 = vand.u32 %v278, 4294901760
        %1826 = vmatpush.msra.mxu0 %v1825
        %v1827 = vand.u32 %v277, 4294901760
        %1828 = vmatpush.msra.mxu0 %v1827
        %v1829 = vand.u32 %v205, 4294901760
        %v1830 = vsub.f32 %v205, %v1829
        %v1831 = vand.u32 %v1830, 4294901760
        %v1832 = vsub.f32 %v1830, %v1831
        %v1833 = vand.u32 %v1832, 4294901760
        %1834 = vmatmul.f32.gmra.mxu0 %v1833
        %v1835 = vpop.f32.mrf.mxu0
        %v1836 = vadd.f32 %v1791, %v1835
        %v1837 = vand.u32 %v211, 4294901760
        %v1838 = vsub.f32 %v211, %v1837
        %v1839 = vand.u32 %v1838, 4294901760
        %v1840 = vsub.f32 %v1838, %v1839
        %v1841 = vand.u32 %v1840, 4294901760
        %1842 = vmatmul.f32.gmra.mxu0 %v1841
        %v1843 = vpop.f32.mrf.mxu0
        %v1844 = vadd.f32 %v1795, %v1843
        %1845 = vdwg.mxu0
        %v1846 = vand.u32 %v292, 4294901760
        %v1847 = vsub.f32 %v292, %v1846
        %v1848 = vand.u32 %v1847, 4294901760
        %v1849 = vsub.f32 %v1847, %v1848
        %v1850 = vand.u32 %v1849, 4294901760
        %1851 = vmatpush.msra.mxu0 %v1850
        %v1852 = vand.u32 %v291, 4294901760
        %v1853 = vsub.f32 %v291, %v1852
        %v1854 = vand.u32 %v1853, 4294901760
        %v1855 = vsub.f32 %v1853, %v1854
        %v1856 = vand.u32 %v1855, 4294901760
        %1857 = vmatpush.msra.mxu0 %v1856
        %v1858 = vand.u32 %v290, 4294901760
        %v1859 = vsub.f32 %v290, %v1858
        %v1860 = vand.u32 %v1859, 4294901760
        %v1861 = vsub.f32 %v1859, %v1860
        %v1862 = vand.u32 %v1861, 4294901760
        %1863 = vmatpush.msra.mxu0 %v1862
        %v1864 = vand.u32 %v289, 4294901760
        %v1865 = vsub.f32 %v289, %v1864
        %v1866 = vand.u32 %v1865, 4294901760
        %v1867 = vsub.f32 %v1865, %v1866
        %v1868 = vand.u32 %v1867, 4294901760
        %1869 = vmatpush.msra.mxu0 %v1868
        %v1870 = vand.u32 %v288, 4294901760
        %v1871 = vsub.f32 %v288, %v1870
        %v1872 = vand.u32 %v1871, 4294901760
        %v1873 = vsub.f32 %v1871, %v1872
        %v1874 = vand.u32 %v1873, 4294901760
        %1875 = vmatpush.msra.mxu0 %v1874
        %v1876 = vand.u32 %v287, 4294901760
        %v1877 = vsub.f32 %v287, %v1876
        %v1878 = vand.u32 %v1877, 4294901760
        %v1879 = vsub.f32 %v1877, %v1878
        %v1880 = vand.u32 %v1879, 4294901760
        %1881 = vmatpush.msra.mxu0 %v1880
        %v1882 = vand.u32 %v286, 4294901760
        %v1883 = vsub.f32 %v286, %v1882
        %v1884 = vand.u32 %v1883, 4294901760
        %v1885 = vsub.f32 %v1883, %v1884
        %v1886 = vand.u32 %v1885, 4294901760
        %1887 = vmatpush.msra.mxu0 %v1886
        %v1888 = vand.u32 %v285, 4294901760
        %v1889 = vsub.f32 %v285, %v1888
        %v1890 = vand.u32 %v1889, 4294901760
        %v1891 = vsub.f32 %v1889, %v1890
        %v1892 = vand.u32 %v1891, 4294901760
        %1893 = vmatpush.msra.mxu0 %v1892
        %v1894 = vand.u32 %v284, 4294901760
        %v1895 = vsub.f32 %v284, %v1894
        %v1896 = vand.u32 %v1895, 4294901760
        %v1897 = vsub.f32 %v1895, %v1896
        %v1898 = vand.u32 %v1897, 4294901760
        %1899 = vmatpush.msra.mxu0 %v1898
        %v1900 = vand.u32 %v283, 4294901760
        %v1901 = vsub.f32 %v283, %v1900
        %v1902 = vand.u32 %v1901, 4294901760
        %v1903 = vsub.f32 %v1901, %v1902
        %v1904 = vand.u32 %v1903, 4294901760
        %1905 = vmatpush.msra.mxu0 %v1904
        %v1906 = vand.u32 %v282, 4294901760
        %v1907 = vsub.f32 %v282, %v1906
        %v1908 = vand.u32 %v1907, 4294901760
        %v1909 = vsub.f32 %v1907, %v1908
        %v1910 = vand.u32 %v1909, 4294901760
        %1911 = vmatpush.msra.mxu0 %v1910
        %v1912 = vand.u32 %v281, 4294901760
        %v1913 = vsub.f32 %v281, %v1912
        %v1914 = vand.u32 %v1913, 4294901760
        %v1915 = vsub.f32 %v1913, %v1914
        %v1916 = vand.u32 %v1915, 4294901760
        %1917 = vmatpush.msra.mxu0 %v1916
        %v1918 = vand.u32 %v280, 4294901760
        %v1919 = vsub.f32 %v280, %v1918
        %v1920 = vand.u32 %v1919, 4294901760
        %v1921 = vsub.f32 %v1919, %v1920
        %v1922 = vand.u32 %v1921, 4294901760
        %1923 = vmatpush.msra.mxu0 %v1922
        %v1924 = vand.u32 %v279, 4294901760
        %v1925 = vsub.f32 %v279, %v1924
        %v1926 = vand.u32 %v1925, 4294901760
        %v1927 = vsub.f32 %v1925, %v1926
        %v1928 = vand.u32 %v1927, 4294901760
        %1929 = vmatpush.msra.mxu0 %v1928
        %v1930 = vand.u32 %v278, 4294901760
        %v1931 = vsub.f32 %v278, %v1930
        %v1932 = vand.u32 %v1931, 4294901760
        %v1933 = vsub.f32 %v1931, %v1932
        %v1934 = vand.u32 %v1933, 4294901760
        %1935 = vmatpush.msra.mxu0 %v1934
        %v1936 = vand.u32 %v277, 4294901760
        %v1937 = vsub.f32 %v277, %v1936
        %v1938 = vand.u32 %v1937, 4294901760
        %v1939 = vsub.f32 %v1937, %v1938
        %v1940 = vand.u32 %v1939, 4294901760
        %1941 = vmatpush.msra.mxu0 %v1940
        %v1942 = vand.u32 %v205, 4294901760
        %1943 = vmatmul.f32.gmra.mxu0 %v1942
        %v1944 = vpop.f32.mrf.mxu0
        %v1945 = vadd.f32 %v1836, %v1944
        %v1946 = vand.u32 %v211, 4294901760
        %1947 = vmatmul.f32.gmra.mxu0 %v1946
        %v1948 = vpop.f32.mrf.mxu0
        %v1949 = vadd.f32 %v1844, %v1948
        %1950 = vdwg.mxu0
        %v1951 = vand.u32 %v292, 4294901760
        %v1952 = vsub.f32 %v292, %v1951
        %1953 = vmatpush.msra.mxu0 %v1952
        %v1954 = vand.u32 %v291, 4294901760
        %v1955 = vsub.f32 %v291, %v1954
        %1956 = vmatpush.msra.mxu0 %v1955
        %v1957 = vand.u32 %v290, 4294901760
        %v1958 = vsub.f32 %v290, %v1957
        %1959 = vmatpush.msra.mxu0 %v1958
        %v1960 = vand.u32 %v289, 4294901760
        %v1961 = vsub.f32 %v289, %v1960
        %1962 = vmatpush.msra.mxu0 %v1961
        %v1963 = vand.u32 %v288, 4294901760
        %v1964 = vsub.f32 %v288, %v1963
        %1965 = vmatpush.msra.mxu0 %v1964
        %v1966 = vand.u32 %v287, 4294901760
        %v1967 = vsub.f32 %v287, %v1966
        %1968 = vmatpush.msra.mxu0 %v1967
        %v1969 = vand.u32 %v286, 4294901760
        %v1970 = vsub.f32 %v286, %v1969
        %1971 = vmatpush.msra.mxu0 %v1970
        %v1972 = vand.u32 %v285, 4294901760
        %v1973 = vsub.f32 %v285, %v1972
        %1974 = vmatpush.msra.mxu0 %v1973
        %v1975 = vand.u32 %v284, 4294901760
        %v1976 = vsub.f32 %v284, %v1975
        %1977 = vmatpush.msra.mxu0 %v1976
        %v1978 = vand.u32 %v283, 4294901760
        %v1979 = vsub.f32 %v283, %v1978
        %1980 = vmatpush.msra.mxu0 %v1979
        %v1981 = vand.u32 %v282, 4294901760
        %v1982 = vsub.f32 %v282, %v1981
        %1983 = vmatpush.msra.mxu0 %v1982
        %v1984 = vand.u32 %v281, 4294901760
        %v1985 = vsub.f32 %v281, %v1984
        %1986 = vmatpush.msra.mxu0 %v1985
        %v1987 = vand.u32 %v280, 4294901760
        %v1988 = vsub.f32 %v280, %v1987
        %1989 = vmatpush.msra.mxu0 %v1988
        %v1990 = vand.u32 %v279, 4294901760
        %v1991 = vsub.f32 %v279, %v1990
        %1992 = vmatpush.msra.mxu0 %v1991
        %v1993 = vand.u32 %v278, 4294901760
        %v1994 = vsub.f32 %v278, %v1993
        %1995 = vmatpush.msra.mxu0 %v1994
        %v1996 = vand.u32 %v277, 4294901760
        %v1997 = vsub.f32 %v277, %v1996
        %1998 = vmatpush.msra.mxu0 %v1997
        %v1999 = vand.u32 %v205, 4294901760
        %v2000 = vsub.f32 %v205, %v1999
        %2001 = vmatmul.f32.gmra.mxu0 %v2000
        %v2002 = vpop.f32.mrf.mxu0
        %v2003 = vadd.f32 %v1945, %v2002
        %v2004 = vand.u32 %v211, 4294901760
        %v2005 = vsub.f32 %v211, %v2004
        %2006 = vmatmul.f32.gmra.mxu0 %v2005
        %v2007 = vpop.f32.mrf.mxu0
        %v2008 = vadd.f32 %v1949, %v2007
        %2009 = vdwg.mxu0
        %v2010 = vand.u32 %v292, 4294901760
        %2011 = vmatpush.msra.mxu0 %v2010
        %v2012 = vand.u32 %v291, 4294901760
        %2013 = vmatpush.msra.mxu0 %v2012
        %v2014 = vand.u32 %v290, 4294901760
        %2015 = vmatpush.msra.mxu0 %v2014
        %v2016 = vand.u32 %v289, 4294901760
        %2017 = vmatpush.msra.mxu0 %v2016
        %v2018 = vand.u32 %v288, 4294901760
        %2019 = vmatpush.msra.mxu0 %v2018
        %v2020 = vand.u32 %v287, 4294901760
        %2021 = vmatpush.msra.mxu0 %v2020
        %v2022 = vand.u32 %v286, 4294901760
        %2023 = vmatpush.msra.mxu0 %v2022
        %v2024 = vand.u32 %v285, 4294901760
        %2025 = vmatpush.msra.mxu0 %v2024
        %v2026 = vand.u32 %v284, 4294901760
        %2027 = vmatpush.msra.mxu0 %v2026
        %v2028 = vand.u32 %v283, 4294901760
        %2029 = vmatpush.msra.mxu0 %v2028
        %v2030 = vand.u32 %v282, 4294901760
        %2031 = vmatpush.msra.mxu0 %v2030
        %v2032 = vand.u32 %v281, 4294901760
        %2033 = vmatpush.msra.mxu0 %v2032
        %v2034 = vand.u32 %v280, 4294901760
        %2035 = vmatpush.msra.mxu0 %v2034
        %v2036 = vand.u32 %v279, 4294901760
        %2037 = vmatpush.msra.mxu0 %v2036
        %v2038 = vand.u32 %v278, 4294901760
        %2039 = vmatpush.msra.mxu0 %v2038
        %v2040 = vand.u32 %v277, 4294901760
        %2041 = vmatpush.msra.mxu0 %v2040
        %v2042 = vand.u32 %v205, 4294901760
        %v2043 = vsub.f32 %v205, %v2042
        %v2044 = vand.u32 %v2043, 4294901760
        %2045 = vmatmul.f32.gmra.mxu0 %v2044
        %v2046 = vpop.f32.mrf.mxu0
        %v2047 = vadd.f32 %v2003, %v2046
        %v2048 = vand.u32 %v211, 4294901760
        %v2049 = vsub.f32 %v211, %v2048
        %v2050 = vand.u32 %v2049, 4294901760
        %2051 = vmatmul.f32.gmra.mxu0 %v2050
        %v2052 = vpop.f32.mrf.mxu0
        %v2053 = vadd.f32 %v2008, %v2052
        %2054 = vdwg.mxu0
        %v2055 = vand.u32 %v292, 4294901760
        %v2056 = vsub.f32 %v292, %v2055
        %v2057 = vand.u32 %v2056, 4294901760
        %2058 = vmatpush.msra.mxu0 %v2057
        %v2059 = vand.u32 %v291, 4294901760
        %v2060 = vsub.f32 %v291, %v2059
        %v2061 = vand.u32 %v2060, 4294901760
        %2062 = vmatpush.msra.mxu0 %v2061
        %v2063 = vand.u32 %v290, 4294901760
        %v2064 = vsub.f32 %v290, %v2063
        %v2065 = vand.u32 %v2064, 4294901760
        %2066 = vmatpush.msra.mxu0 %v2065
        %v2067 = vand.u32 %v289, 4294901760
        %v2068 = vsub.f32 %v289, %v2067
        %v2069 = vand.u32 %v2068, 4294901760
        %2070 = vmatpush.msra.mxu0 %v2069
        %v2071 = vand.u32 %v288, 4294901760
        %v2072 = vsub.f32 %v288, %v2071
        %v2073 = vand.u32 %v2072, 4294901760
        %2074 = vmatpush.msra.mxu0 %v2073
        %v2075 = vand.u32 %v287, 4294901760
        %v2076 = vsub.f32 %v287, %v2075
        %v2077 = vand.u32 %v2076, 4294901760
        %2078 = vmatpush.msra.mxu0 %v2077
        %v2079 = vand.u32 %v286, 4294901760
        %v2080 = vsub.f32 %v286, %v2079
        %v2081 = vand.u32 %v2080, 4294901760
        %2082 = vmatpush.msra.mxu0 %v2081
        %v2083 = vand.u32 %v285, 4294901760
        %v2084 = vsub.f32 %v285, %v2083
        %v2085 = vand.u32 %v2084, 4294901760
        %2086 = vmatpush.msra.mxu0 %v2085
        %v2087 = vand.u32 %v284, 4294901760
        %v2088 = vsub.f32 %v284, %v2087
        %v2089 = vand.u32 %v2088, 4294901760
        %2090 = vmatpush.msra.mxu0 %v2089
        %v2091 = vand.u32 %v283, 4294901760
        %v2092 = vsub.f32 %v283, %v2091
        %v2093 = vand.u32 %v2092, 4294901760
        %2094 = vmatpush.msra.mxu0 %v2093
        %v2095 = vand.u32 %v282, 4294901760
        %v2096 = vsub.f32 %v282, %v2095
        %v2097 = vand.u32 %v2096, 4294901760
        %2098 = vmatpush.msra.mxu0 %v2097
        %v2099 = vand.u32 %v281, 4294901760
        %v2100 = vsub.f32 %v281, %v2099
        %v2101 = vand.u32 %v2100, 4294901760
        %2102 = vmatpush.msra.mxu0 %v2101
        %v2103 = vand.u32 %v280, 4294901760
        %v2104 = vsub.f32 %v280, %v2103
        %v2105 = vand.u32 %v2104, 4294901760
        %2106 = vmatpush.msra.mxu0 %v2105
        %v2107 = vand.u32 %v279, 4294901760
        %v2108 = vsub.f32 %v279, %v2107
        %v2109 = vand.u32 %v2108, 4294901760
        %2110 = vmatpush.msra.mxu0 %v2109
        %v2111 = vand.u32 %v278, 4294901760
        %v2112 = vsub.f32 %v278, %v2111
        %v2113 = vand.u32 %v2112, 4294901760
        %2114 = vmatpush.msra.mxu0 %v2113
        %v2115 = vand.u32 %v277, 4294901760
        %v2116 = vsub.f32 %v277, %v2115
        %v2117 = vand.u32 %v2116, 4294901760
        %2118 = vmatpush.msra.mxu0 %v2117
        %v2119 = vand.u32 %v205, 4294901760
        %2120 = vmatmul.f32.gmra.mxu0 %v2119
        %v2121 = vpop.f32.mrf.mxu0
        %v2122 = vadd.f32 %v2047, %v2121
        %v2123 = vand.u32 %v211, 4294901760
        %2124 = vmatmul.f32.gmra.mxu0 %v2123
        %v2125 = vpop.f32.mrf.mxu0
        %v2126 = vadd.f32 %v2053, %v2125
        %2127 = vdwg.mxu0
        %v2128 = vand.u32 %v292, 4294901760
        %2129 = vmatpush.msra.mxu0 %v2128
        %v2130 = vand.u32 %v291, 4294901760
        %2131 = vmatpush.msra.mxu0 %v2130
        %v2132 = vand.u32 %v290, 4294901760
        %2133 = vmatpush.msra.mxu0 %v2132
        %v2134 = vand.u32 %v289, 4294901760
        %2135 = vmatpush.msra.mxu0 %v2134
        %v2136 = vand.u32 %v288, 4294901760
        %2137 = vmatpush.msra.mxu0 %v2136
        %v2138 = vand.u32 %v287, 4294901760
        %2139 = vmatpush.msra.mxu0 %v2138
        %v2140 = vand.u32 %v286, 4294901760
        %2141 = vmatpush.msra.mxu0 %v2140
        %v2142 = vand.u32 %v285, 4294901760
        %2143 = vmatpush.msra.mxu0 %v2142
        %v2144 = vand.u32 %v284, 4294901760
        %2145 = vmatpush.msra.mxu0 %v2144
        %v2146 = vand.u32 %v283, 4294901760
        %2147 = vmatpush.msra.mxu0 %v2146
        %v2148 = vand.u32 %v282, 4294901760
        %2149 = vmatpush.msra.mxu0 %v2148
        %v2150 = vand.u32 %v281, 4294901760
        %2151 = vmatpush.msra.mxu0 %v2150
        %v2152 = vand.u32 %v280, 4294901760
        %2153 = vmatpush.msra.mxu0 %v2152
        %v2154 = vand.u32 %v279, 4294901760
        %2155 = vmatpush.msra.mxu0 %v2154
        %v2156 = vand.u32 %v278, 4294901760
        %2157 = vmatpush.msra.mxu0 %v2156
        %v2158 = vand.u32 %v277, 4294901760
        %2159 = vmatpush.msra.mxu0 %v2158
        %v2160 = vand.u32 %v205, 4294901760
        %2161 = vmatmul.f32.gmra.mxu0 %v2160
        %v2162 = vpop.f32.mrf.mxu0
        %v2163 = vadd.f32 %v2122, %v2162
        %v2164 = vand.u32 %v211, 4294901760
        %2165 = vmatmul.f32.gmra.mxu0 %v2164
        %v2166 = vpop.f32.mrf.mxu0
        %v2167 = vadd.f32 %v2126, %v2166
        %2168 = vdwg.mxu0
        %v2169 = vand.u32 %v308, 4294901760
        %2170 = vmatpush.msra.mxu0 %v2169
        %v2171 = vand.u32 %v307, 4294901760
        %2172 = vmatpush.msra.mxu0 %v2171
        %v2173 = vand.u32 %v306, 4294901760
        %2174 = vmatpush.msra.mxu0 %v2173
        %v2175 = vand.u32 %v305, 4294901760
        %2176 = vmatpush.msra.mxu0 %v2175
        %v2177 = vand.u32 %v304, 4294901760
        %2178 = vmatpush.msra.mxu0 %v2177
        %v2179 = vand.u32 %v303, 4294901760
        %2180 = vmatpush.msra.mxu0 %v2179
        %v2181 = vand.u32 %v302, 4294901760
        %2182 = vmatpush.msra.mxu0 %v2181
        %v2183 = vand.u32 %v301, 4294901760
        %2184 = vmatpush.msra.mxu0 %v2183
        %v2185 = vand.u32 %v300, 4294901760
        %2186 = vmatpush.msra.mxu0 %v2185
        %v2187 = vand.u32 %v299, 4294901760
        %2188 = vmatpush.msra.mxu0 %v2187
        %v2189 = vand.u32 %v298, 4294901760
        %2190 = vmatpush.msra.mxu0 %v2189
        %v2191 = vand.u32 %v297, 4294901760
        %2192 = vmatpush.msra.mxu0 %v2191
        %v2193 = vand.u32 %v296, 4294901760
        %2194 = vmatpush.msra.mxu0 %v2193
        %v2195 = vand.u32 %v295, 4294901760
        %2196 = vmatpush.msra.mxu0 %v2195
        %v2197 = vand.u32 %v294, 4294901760
        %2198 = vmatpush.msra.mxu0 %v2197
        %v2199 = vand.u32 %v293, 4294901760
        %2200 = vmatpush.msra.mxu0 %v2199
        %v2201 = vand.u32 %v206, 4294901760
        %v2202 = vsub.f32 %v206, %v2201
        %v2203 = vand.u32 %v2202, 4294901760
        %v2204 = vsub.f32 %v2202, %v2203
        %v2205 = vand.u32 %v2204, 4294901760
        %2206 = vmatmul.f32.gmra.mxu0 %v2205
        %v2207 = vpop.f32.mrf.mxu0
        %v2208 = vadd.f32 %v2163, %v2207
        %v2209 = vand.u32 %v212, 4294901760
        %v2210 = vsub.f32 %v212, %v2209
        %v2211 = vand.u32 %v2210, 4294901760
        %v2212 = vsub.f32 %v2210, %v2211
        %v2213 = vand.u32 %v2212, 4294901760
        %2214 = vmatmul.f32.gmra.mxu0 %v2213
        %v2215 = vpop.f32.mrf.mxu0
        %v2216 = vadd.f32 %v2167, %v2215
        %2217 = vdwg.mxu0
        %v2218 = vand.u32 %v308, 4294901760
        %v2219 = vsub.f32 %v308, %v2218
        %v2220 = vand.u32 %v2219, 4294901760
        %v2221 = vsub.f32 %v2219, %v2220
        %v2222 = vand.u32 %v2221, 4294901760
        %2223 = vmatpush.msra.mxu0 %v2222
        %v2224 = vand.u32 %v307, 4294901760
        %v2225 = vsub.f32 %v307, %v2224
        %v2226 = vand.u32 %v2225, 4294901760
        %v2227 = vsub.f32 %v2225, %v2226
        %v2228 = vand.u32 %v2227, 4294901760
        %2229 = vmatpush.msra.mxu0 %v2228
        %v2230 = vand.u32 %v306, 4294901760
        %v2231 = vsub.f32 %v306, %v2230
        %v2232 = vand.u32 %v2231, 4294901760
        %v2233 = vsub.f32 %v2231, %v2232
        %v2234 = vand.u32 %v2233, 4294901760
        %2235 = vmatpush.msra.mxu0 %v2234
        %v2236 = vand.u32 %v305, 4294901760
        %v2237 = vsub.f32 %v305, %v2236
        %v2238 = vand.u32 %v2237, 4294901760
        %v2239 = vsub.f32 %v2237, %v2238
        %v2240 = vand.u32 %v2239, 4294901760
        %2241 = vmatpush.msra.mxu0 %v2240
        %v2242 = vand.u32 %v304, 4294901760
        %v2243 = vsub.f32 %v304, %v2242
        %v2244 = vand.u32 %v2243, 4294901760
        %v2245 = vsub.f32 %v2243, %v2244
        %v2246 = vand.u32 %v2245, 4294901760
        %2247 = vmatpush.msra.mxu0 %v2246
        %v2248 = vand.u32 %v303, 4294901760
        %v2249 = vsub.f32 %v303, %v2248
        %v2250 = vand.u32 %v2249, 4294901760
        %v2251 = vsub.f32 %v2249, %v2250
        %v2252 = vand.u32 %v2251, 4294901760
        %2253 = vmatpush.msra.mxu0 %v2252
        %v2254 = vand.u32 %v302, 4294901760
        %v2255 = vsub.f32 %v302, %v2254
        %v2256 = vand.u32 %v2255, 4294901760
        %v2257 = vsub.f32 %v2255, %v2256
        %v2258 = vand.u32 %v2257, 4294901760
        %2259 = vmatpush.msra.mxu0 %v2258
        %v2260 = vand.u32 %v301, 4294901760
        %v2261 = vsub.f32 %v301, %v2260
        %v2262 = vand.u32 %v2261, 4294901760
        %v2263 = vsub.f32 %v2261, %v2262
        %v2264 = vand.u32 %v2263, 4294901760
        %2265 = vmatpush.msra.mxu0 %v2264
        %v2266 = vand.u32 %v300, 4294901760
        %v2267 = vsub.f32 %v300, %v2266
        %v2268 = vand.u32 %v2267, 4294901760
        %v2269 = vsub.f32 %v2267, %v2268
        %v2270 = vand.u32 %v2269, 4294901760
        %2271 = vmatpush.msra.mxu0 %v2270
        %v2272 = vand.u32 %v299, 4294901760
        %v2273 = vsub.f32 %v299, %v2272
        %v2274 = vand.u32 %v2273, 4294901760
        %v2275 = vsub.f32 %v2273, %v2274
        %v2276 = vand.u32 %v2275, 4294901760
        %2277 = vmatpush.msra.mxu0 %v2276
        %v2278 = vand.u32 %v298, 4294901760
        %v2279 = vsub.f32 %v298, %v2278
        %v2280 = vand.u32 %v2279, 4294901760
        %v2281 = vsub.f32 %v2279, %v2280
        %v2282 = vand.u32 %v2281, 4294901760
        %2283 = vmatpush.msra.mxu0 %v2282
        %v2284 = vand.u32 %v297, 4294901760
        %v2285 = vsub.f32 %v297, %v2284
        %v2286 = vand.u32 %v2285, 4294901760
        %v2287 = vsub.f32 %v2285, %v2286
        %v2288 = vand.u32 %v2287, 4294901760
        %2289 = vmatpush.msra.mxu0 %v2288
        %v2290 = vand.u32 %v296, 4294901760
        %v2291 = vsub.f32 %v296, %v2290
        %v2292 = vand.u32 %v2291, 4294901760
        %v2293 = vsub.f32 %v2291, %v2292
        %v2294 = vand.u32 %v2293, 4294901760
        %2295 = vmatpush.msra.mxu0 %v2294
        %v2296 = vand.u32 %v295, 4294901760
        %v2297 = vsub.f32 %v295, %v2296
        %v2298 = vand.u32 %v2297, 4294901760
        %v2299 = vsub.f32 %v2297, %v2298
        %v2300 = vand.u32 %v2299, 4294901760
        %2301 = vmatpush.msra.mxu0 %v2300
        %v2302 = vand.u32 %v294, 4294901760
        %v2303 = vsub.f32 %v294, %v2302
        %v2304 = vand.u32 %v2303, 4294901760
        %v2305 = vsub.f32 %v2303, %v2304
        %v2306 = vand.u32 %v2305, 4294901760
        %2307 = vmatpush.msra.mxu0 %v2306
        %v2308 = vand.u32 %v293, 4294901760
        %v2309 = vsub.f32 %v293, %v2308
        %v2310 = vand.u32 %v2309, 4294901760
        %v2311 = vsub.f32 %v2309, %v2310
        %v2312 = vand.u32 %v2311, 4294901760
        %2313 = vmatpush.msra.mxu0 %v2312
        %v2314 = vand.u32 %v206, 4294901760
        %2315 = vmatmul.f32.gmra.mxu0 %v2314
        %v2316 = vpop.f32.mrf.mxu0
        %v2317 = vadd.f32 %v2208, %v2316
        %v2318 = vand.u32 %v212, 4294901760
        %2319 = vmatmul.f32.gmra.mxu0 %v2318
        %v2320 = vpop.f32.mrf.mxu0
        %v2321 = vadd.f32 %v2216, %v2320
        %2322 = vdwg.mxu0
        %v2323 = vand.u32 %v308, 4294901760
        %v2324 = vsub.f32 %v308, %v2323
        %2325 = vmatpush.msra.mxu0 %v2324
        %v2326 = vand.u32 %v307, 4294901760
        %v2327 = vsub.f32 %v307, %v2326
        %2328 = vmatpush.msra.mxu0 %v2327
        %v2329 = vand.u32 %v306, 4294901760
        %v2330 = vsub.f32 %v306, %v2329
        %2331 = vmatpush.msra.mxu0 %v2330
        %v2332 = vand.u32 %v305, 4294901760
        %v2333 = vsub.f32 %v305, %v2332
        %2334 = vmatpush.msra.mxu0 %v2333
        %v2335 = vand.u32 %v304, 4294901760
        %v2336 = vsub.f32 %v304, %v2335
        %2337 = vmatpush.msra.mxu0 %v2336
        %v2338 = vand.u32 %v303, 4294901760
        %v2339 = vsub.f32 %v303, %v2338
        %2340 = vmatpush.msra.mxu0 %v2339
        %v2341 = vand.u32 %v302, 4294901760
        %v2342 = vsub.f32 %v302, %v2341
        %2343 = vmatpush.msra.mxu0 %v2342
        %v2344 = vand.u32 %v301, 4294901760
        %v2345 = vsub.f32 %v301, %v2344
        %2346 = vmatpush.msra.mxu0 %v2345
        %v2347 = vand.u32 %v300, 4294901760
        %v2348 = vsub.f32 %v300, %v2347
        %2349 = vmatpush.msra.mxu0 %v2348
        %v2350 = vand.u32 %v299, 4294901760
        %v2351 = vsub.f32 %v299, %v2350
        %2352 = vmatpush.msra.mxu0 %v2351
        %v2353 = vand.u32 %v298, 4294901760
        %v2354 = vsub.f32 %v298, %v2353
        %2355 = vmatpush.msra.mxu0 %v2354
        %v2356 = vand.u32 %v297, 4294901760
        %v2357 = vsub.f32 %v297, %v2356
        %2358 = vmatpush.msra.mxu0 %v2357
        %v2359 = vand.u32 %v296, 4294901760
        %v2360 = vsub.f32 %v296, %v2359
        %2361 = vmatpush.msra.mxu0 %v2360
        %v2362 = vand.u32 %v295, 4294901760
        %v2363 = vsub.f32 %v295, %v2362
        %2364 = vmatpush.msra.mxu0 %v2363
        %v2365 = vand.u32 %v294, 4294901760
        %v2366 = vsub.f32 %v294, %v2365
        %2367 = vmatpush.msra.mxu0 %v2366
        %v2368 = vand.u32 %v293, 4294901760
        %v2369 = vsub.f32 %v293, %v2368
        %2370 = vmatpush.msra.mxu0 %v2369
        %v2371 = vand.u32 %v206, 4294901760
        %v2372 = vsub.f32 %v206, %v2371
        %2373 = vmatmul.f32.gmra.mxu0 %v2372
        %v2374 = vpop.f32.mrf.mxu0
        %v2375 = vadd.f32 %v2317, %v2374
        %v2376 = vand.u32 %v212, 4294901760
        %v2377 = vsub.f32 %v212, %v2376
        %2378 = vmatmul.f32.gmra.mxu0 %v2377
        %v2379 = vpop.f32.mrf.mxu0
        %v2380 = vadd.f32 %v2321, %v2379
        %2381 = vdwg.mxu0
        %v2382 = vand.u32 %v308, 4294901760
        %2383 = vmatpush.msra.mxu0 %v2382
        %v2384 = vand.u32 %v307, 4294901760
        %2385 = vmatpush.msra.mxu0 %v2384
        %v2386 = vand.u32 %v306, 4294901760
        %2387 = vmatpush.msra.mxu0 %v2386
        %v2388 = vand.u32 %v305, 4294901760
        %2389 = vmatpush.msra.mxu0 %v2388
        %v2390 = vand.u32 %v304, 4294901760
        %2391 = vmatpush.msra.mxu0 %v2390
        %v2392 = vand.u32 %v303, 4294901760
        %2393 = vmatpush.msra.mxu0 %v2392
        %v2394 = vand.u32 %v302, 4294901760
        %2395 = vmatpush.msra.mxu0 %v2394
        %v2396 = vand.u32 %v301, 4294901760
        %2397 = vmatpush.msra.mxu0 %v2396
        %v2398 = vand.u32 %v300, 4294901760
        %2399 = vmatpush.msra.mxu0 %v2398
        %v2400 = vand.u32 %v299, 4294901760
        %2401 = vmatpush.msra.mxu0 %v2400
        %v2402 = vand.u32 %v298, 4294901760
        %2403 = vmatpush.msra.mxu0 %v2402
        %v2404 = vand.u32 %v297, 4294901760
        %2405 = vmatpush.msra.mxu0 %v2404
        %v2406 = vand.u32 %v296, 4294901760
        %2407 = vmatpush.msra.mxu0 %v2406
        %v2408 = vand.u32 %v295, 4294901760
        %2409 = vmatpush.msra.mxu0 %v2408
        %v2410 = vand.u32 %v294, 4294901760
        %2411 = vmatpush.msra.mxu0 %v2410
        %v2412 = vand.u32 %v293, 4294901760
        %2413 = vmatpush.msra.mxu0 %v2412
        %v2414 = vand.u32 %v206, 4294901760
        %v2415 = vsub.f32 %v206, %v2414
        %v2416 = vand.u32 %v2415, 4294901760
        %2417 = vmatmul.f32.gmra.mxu0 %v2416
        %v2418 = vpop.f32.mrf.mxu0
        %v2419 = vadd.f32 %v2375, %v2418
        %v2420 = vand.u32 %v212, 4294901760
        %v2421 = vsub.f32 %v212, %v2420
        %v2422 = vand.u32 %v2421, 4294901760
        %2423 = vmatmul.f32.gmra.mxu0 %v2422
        %v2424 = vpop.f32.mrf.mxu0
        %v2425 = vadd.f32 %v2380, %v2424
        %2426 = vdwg.mxu0
        %v2427 = vand.u32 %v308, 4294901760
        %v2428 = vsub.f32 %v308, %v2427
        %v2429 = vand.u32 %v2428, 4294901760
        %2430 = vmatpush.msra.mxu0 %v2429
        %v2431 = vand.u32 %v307, 4294901760
        %v2432 = vsub.f32 %v307, %v2431
        %v2433 = vand.u32 %v2432, 4294901760
        %2434 = vmatpush.msra.mxu0 %v2433
        %v2435 = vand.u32 %v306, 4294901760
        %v2436 = vsub.f32 %v306, %v2435
        %v2437 = vand.u32 %v2436, 4294901760
        %2438 = vmatpush.msra.mxu0 %v2437
        %v2439 = vand.u32 %v305, 4294901760
        %v2440 = vsub.f32 %v305, %v2439
        %v2441 = vand.u32 %v2440, 4294901760
        %2442 = vmatpush.msra.mxu0 %v2441
        %v2443 = vand.u32 %v304, 4294901760
        %v2444 = vsub.f32 %v304, %v2443
        %v2445 = vand.u32 %v2444, 4294901760
        %2446 = vmatpush.msra.mxu0 %v2445
        %v2447 = vand.u32 %v303, 4294901760
        %v2448 = vsub.f32 %v303, %v2447
        %v2449 = vand.u32 %v2448, 4294901760
        %2450 = vmatpush.msra.mxu0 %v2449
        %v2451 = vand.u32 %v302, 4294901760
        %v2452 = vsub.f32 %v302, %v2451
        %v2453 = vand.u32 %v2452, 4294901760
        %2454 = vmatpush.msra.mxu0 %v2453
        %v2455 = vand.u32 %v301, 4294901760
        %v2456 = vsub.f32 %v301, %v2455
        %v2457 = vand.u32 %v2456, 4294901760
        %2458 = vmatpush.msra.mxu0 %v2457
        %v2459 = vand.u32 %v300, 4294901760
        %v2460 = vsub.f32 %v300, %v2459
        %v2461 = vand.u32 %v2460, 4294901760
        %2462 = vmatpush.msra.mxu0 %v2461
        %v2463 = vand.u32 %v299, 4294901760
        %v2464 = vsub.f32 %v299, %v2463
        %v2465 = vand.u32 %v2464, 4294901760
        %2466 = vmatpush.msra.mxu0 %v2465
        %v2467 = vand.u32 %v298, 4294901760
        %v2468 = vsub.f32 %v298, %v2467
        %v2469 = vand.u32 %v2468, 4294901760
        %2470 = vmatpush.msra.mxu0 %v2469
        %v2471 = vand.u32 %v297, 4294901760
        %v2472 = vsub.f32 %v297, %v2471
        %v2473 = vand.u32 %v2472, 4294901760
        %2474 = vmatpush.msra.mxu0 %v2473
        %v2475 = vand.u32 %v296, 4294901760
        %v2476 = vsub.f32 %v296, %v2475
        %v2477 = vand.u32 %v2476, 4294901760
        %2478 = vmatpush.msra.mxu0 %v2477
        %v2479 = vand.u32 %v295, 4294901760
        %v2480 = vsub.f32 %v295, %v2479
        %v2481 = vand.u32 %v2480, 4294901760
        %2482 = vmatpush.msra.mxu0 %v2481
        %v2483 = vand.u32 %v294, 4294901760
        %v2484 = vsub.f32 %v294, %v2483
        %v2485 = vand.u32 %v2484, 4294901760
        %2486 = vmatpush.msra.mxu0 %v2485
        %v2487 = vand.u32 %v293, 4294901760
        %v2488 = vsub.f32 %v293, %v2487
        %v2489 = vand.u32 %v2488, 4294901760
        %2490 = vmatpush.msra.mxu0 %v2489
        %v2491 = vand.u32 %v206, 4294901760
        %2492 = vmatmul.f32.gmra.mxu0 %v2491
        %v2493 = vpop.f32.mrf.mxu0
        %v2494 = vadd.f32 %v2419, %v2493
        %v2495 = vand.u32 %v212, 4294901760
        %2496 = vmatmul.f32.gmra.mxu0 %v2495
        %v2497 = vpop.f32.mrf.mxu0
        %v2498 = vadd.f32 %v2425, %v2497
        %2499 = vdwg.mxu0
        %v2500 = vand.u32 %v308, 4294901760
        %2501 = vmatpush.msra.mxu0 %v2500
        %v2502 = vand.u32 %v307, 4294901760
        %2503 = vmatpush.msra.mxu0 %v2502
        %v2504 = vand.u32 %v306, 4294901760
        %2505 = vmatpush.msra.mxu0 %v2504
        %v2506 = vand.u32 %v305, 4294901760
        %2507 = vmatpush.msra.mxu0 %v2506
        %v2508 = vand.u32 %v304, 4294901760
        %2509 = vmatpush.msra.mxu0 %v2508
        %v2510 = vand.u32 %v303, 4294901760
        %2511 = vmatpush.msra.mxu0 %v2510
        %v2512 = vand.u32 %v302, 4294901760
        %2513 = vmatpush.msra.mxu0 %v2512
        %v2514 = vand.u32 %v301, 4294901760
        %2515 = vmatpush.msra.mxu0 %v2514
        %v2516 = vand.u32 %v300, 4294901760
        %2517 = vmatpush.msra.mxu0 %v2516
        %v2518 = vand.u32 %v299, 4294901760
        %2519 = vmatpush.msra.mxu0 %v2518
        %v2520 = vand.u32 %v298, 4294901760
        %2521 = vmatpush.msra.mxu0 %v2520
        %v2522 = vand.u32 %v297, 4294901760
        %2523 = vmatpush.msra.mxu0 %v2522
        %v2524 = vand.u32 %v296, 4294901760
        %2525 = vmatpush.msra.mxu0 %v2524
        %v2526 = vand.u32 %v295, 4294901760
        %2527 = vmatpush.msra.mxu0 %v2526
        %v2528 = vand.u32 %v294, 4294901760
        %2529 = vmatpush.msra.mxu0 %v2528
        %v2530 = vand.u32 %v293, 4294901760
        %2531 = vmatpush.msra.mxu0 %v2530
        %v2532 = vand.u32 %v206, 4294901760
        %2533 = vmatmul.f32.gmra.mxu0 %v2532
        %v2534 = vpop.f32.mrf.mxu0
        %v2535 = vadd.f32 %v2494, %v2534
        %v2536 = vand.u32 %v212, 4294901760
        %2537 = vmatmul.f32.gmra.mxu0 %v2536
        %v2538 = vpop.f32.mrf.mxu0
        %v2539 = vadd.f32 %v2498, %v2538
        %2540 = vdwg.mxu0
        %v2541 = vsub.f32 0.0, %v2535
        %v2542 = vsub.f32 0.0, %v2539
        %v2543 = vmul.f32 %v2541, 1.442695
        %v2544 = vpow.pop %v2543
        %v2545 = vmul.f32 %v2542, 1.442695
        %v2546 = vpow.pop %v2545
        %v2547 = vadd.f32 %v2544, 1.0
        %v2548 = vadd.f32 %v2546, 1.0
        %v2549 = vrcp.pop %v2547
        %v2550 = vmul.f32 %v2547, %v2549
        %v2551 = vsub.f32 1.0, %v2550
        %v2552 = vmul.f32 %v2549, %v2551
        %v2553 = vadd.f32 %v2549, %v2552
        %vm2554 = vweird.f32 %v2547
        %vm2555 = vweird.f32 %v2549
        %vm2556 = vmor %vm2554, %vm2555
        %v2557 = vsel %vm2556, %v2549, %v2553
        %v2558 = vand.u32 2147483647, %v2547
        %vm2559 = vcmp.eq.f32.partialorder %v2558, 8.507059e+37
        %v2560 = vand.u32 %v2547, 2147483648
        %v2561 = vor.u32 1.1754944e-38, %v2560
        %v2562 = vsel %vm2559, %v2561, %v2557
        %v2563 = vmul.f32 1.0, %v2562
        %v2564 = vrcp.pop %v2548
        %v2565 = vmul.f32 %v2548, %v2564
        %v2566 = vsub.f32 1.0, %v2565
        %v2567 = vmul.f32 %v2564, %v2566
        %v2568 = vadd.f32 %v2564, %v2567
        %vm2569 = vweird.f32 %v2548
        %vm2570 = vweird.f32 %v2564
        %vm2571 = vmor %vm2569, %vm2570
        %v2572 = vsel %vm2571, %v2564, %v2568
        %v2573 = vand.u32 2147483647, %v2548
        %vm2574 = vcmp.eq.f32.partialorder %v2573, 8.507059e+37
        %v2575 = vand.u32 %v2548, 2147483648
        %v2576 = vor.u32 1.1754944e-38, %v2575
        %v2577 = vsel %vm2574, %v2576, %v2572
        %v2578 = vmul.f32 1.0, %v2577
        %2579 = vst [vmem:[%s189] sm:$0xff] %v2563
        %2580 = vst [vmem:[%s189 + $0x8] sm:$0xff] %v2578
        %s2581 = sand.u32 %s75, 1
        %s2582 = scalar_lea.sflag [#allocation4], %s2581
        %s2583 = sand.u32 %s75, 1
        %s2584 = smul.addr %s2583, 16
        %s2585 = scalar_lea.vmem [#allocation7], %s2584
        // Predicated region
        $region37: #{tpu_custom_call.1} parent=27 // pred_check
          %p2586 = pneg %p85
        $region38: #{tpu_custom_call.1} parent=27 // pred_check_branch
          %2588 = sbr.rel (%p2586) target = $region40
        $region39: #{tpu_custom_call.1} parent=27 // pred_region
          %s2589 = smul.u32 2, %s20
          %s2590 = ssub.s32 3, %s2589
          %p2591 = scmp.lt.s32.totalorder %s2590, 2
          %s2592 = scalar_select %p2591, %s2590, 2
          %s2593 = smul.u32 8, %s2592
          %s2594 = ssub.s32 16, %s2593
          %s2595 = sshll.u32 %s2594, 4
          %2596 = vsyncadd %s2582, %s2595
          %p2597 = scmp.ne.s32.totalorder 0, %s2593
          %s2598 = smul.addr %s2589, 8
          %s2599 = scalar_lea.hbm %s2, %s2598
          %s2600 = smul.u32 8, %s2592
          %s2601 = sshll.u32 %s2585, 4
          %s2602 = int_to_ptr.vmem [resolvable:$true] %s2601
          %s2603 = sshll.u32 %s2599, 4
          %s2604 = int_to_ptr.hbm [resolvable:$true] %s2603
          %s2605 = sshll.u32 %s2600, 4
          %2609 = dma.vmem_to_hbm [thread:$0]  (%p2597), %s2602, %s2605, %s2604, %s2582, 128, 128, 8
        $region40: #{tpu_custom_call.1} parent=27 // pred_fallthru
          _
      $region28: #{tpu_custom_call.1} parent=5 // pred_fallthru
        _
      %p2610 = scmp.le.s32.totalorder 2, %s15
      // Predicated region
      $region41: #{tpu_custom_call.1} parent=5 // pred_check
        %p2611 = pneg %p2610
      $region42: #{tpu_custom_call.1} parent=5 // pred_check_branch
        %2613 = sbr.rel (%p2611) target = $region44
      $region43: #{tpu_custom_call.1} parent=5 // pred_region
        %s2614 = ssub.s32 %s15, 2
        // Predicated region
        $region45: #{tpu_custom_call.1} parent=43 // pred_check
          %p2615 = pneg %p91
        $region46: #{tpu_custom_call.1} parent=43 // pred_check_branch
          %2617 = sbr.rel (%p2615) target = $region48
        $region47: #{tpu_custom_call.1} parent=43 // pred_region
          %s2618 = sand.u32 %s76, 1
          %s2619 = scalar_lea.sflag [#allocation4], %s2618
          %s2620 = sand.u32 %s76, 1
          %s2621 = smul.addr %s2620, 16
          %s2622 = scalar_lea.vmem [#allocation7], %s2621
          %2624 = dma.done %s2619, 256
        $region48: #{tpu_custom_call.1} parent=43 // pred_fallthru
          _
      $region44: #{tpu_custom_call.1} parent=5 // pred_fallthru
        _
    $region6: #{tpu_custom_call.1} parent=1 // loop_footer
      %s19 = sadd.s32 1, %s15
    $region7: #{tpu_custom_call.1} parent=1 // loop_footer_branch
      %14 = sbr.rel target = $region3
    $region8: #{tpu_custom_call.1} parent=1 // loop_exit
      _
    %2625 = vsyncpa [#allocation3], 1
    %s2626 = scalar_lea.sflag [#allocation3], 1
    %2627 = vsyncpa %s2626, 1
    %2628 = vsyncpa [#allocation6], 1
    %2629 = vsyncpa [#allocation4], 1
    %s2630 = scalar_lea.sflag [#allocation4], 1
    %2631 = vsyncpa %s2630, 1

</llo_original>
